<compile_context>
chip_gen: v7x
topology: tpu7x:2x2x1
jax: 0.10.0
libtpu: 0.0.40
codegen_flags: <defaults>
</compile_context>

<pallas_src>
import math

import jax
import jax.numpy as jnp
from jax.experimental import pallas as pl
from jax.experimental.pallas import tpu as pltpu

_BN_EPS = 1e-5  # PyTorch BatchNorm1d default


def _pointnet_kernel(x_ref,
                     w1_ref, b1_ref, w2_ref, b2_ref, w3_ref, b3_ref,
                     w4_ref, b4_ref, w5_ref, b5_ref,
                     out_ref):
    """One (channels, TN-points) tile through all five fused (conv1x1 + BN + ReLU) layers.

    x_ref   : (1, 8, TN)        input channels (3, zero-padded to 8) on sublanes,
                                points on lanes
    wK_ref  : (C_out, C_in)     bf16, BN scale folded in
    bK_ref  : (C_out, 1)        f32, BN shift folded in
    out_ref : (1, emb_dims, TN) f32, lane-dense (TN is a multiple of 128)
    """
    def layer(h_bf16, w_ref, b_ref):
        acc = jnp.dot(w_ref[...], h_bf16, preferred_element_type=jnp.float32)
        return jnp.maximum(acc + b_ref[...], 0.0)

    h = layer(x_ref[0].astype(jnp.bfloat16), w1_ref, b1_ref)   # 3(8) -> 64
    h = layer(h.astype(jnp.bfloat16), w2_ref, b2_ref)          # 64   -> 64
    h = layer(h.astype(jnp.bfloat16), w3_ref, b3_ref)          # 64   -> 64
    h = layer(h.astype(jnp.bfloat16), w4_ref, b4_ref)          # 64   -> 128
    h = layer(h.astype(jnp.bfloat16), w5_ref, b5_ref)          # 128  -> emb_dims
    out_ref[0] = h


def _fold_bn_into_conv(w, gamma, beta, mean, var, eps=_BN_EPS):
    """Eval-mode BN(conv1x1(x)) == (scale*W) @ x + (beta - mean*scale)."""
    scale = gamma / jnp.sqrt(var + eps)
    w_eff = w * scale[:, None]               # (C_out, C_in)
    b_eff = (beta - mean * scale)[:, None]   # (C_out, 1)
    return w_eff, b_eff


def _pick_point_tile(n_pad, batch):
    """Largest lane-dense point tile; prefer >= 4 total grid steps (v7x has 2 TCs)."""
    divisors = [t for t in (1024, 512, 256, 128) if n_pad % t == 0]
    for tn in divisors:
        if (batch * n_pad) // tn >= 4:
            return tn
    return divisors[0]


def pointnet_forward(x, params):
    """Pallas PointNet forward.  x: (B, 3, N) float32 -> (B, emb_dims, N) float32."""
    B, c_in, N = x.shape
    c_pad = 8  # pad the tiny 3-channel input up to a full sublane group

    # Fold BN (inference mode) into the conv weights on the host.
    folded = []
    for i in range(1, 6):
        w_eff, b_eff = _fold_bn_into_conv(
            params[f"conv{i}_w"], params[f"bn{i}_gamma"], params[f"bn{i}_beta"],
            params[f"bn{i}_mean"], params[f"bn{i}_var"])
        folded.append([w_eff, b_eff])
    # Layer-1 weight: zero-pad C_in 3 -> 8 to match the zero-padded input channels.
    folded[0][0] = jnp.pad(folded[0][0], ((0, 0), (0, c_pad - c_in)))
    emb_dims = folded[-1][0].shape[0]

    # bf16 weights feed the MXU; biases stay f32 (VPU add in f32).
    flat_params = []
    for w_eff, b_eff in folded:
        flat_params += [w_eff.astype(jnp.bfloat16), b_eff]

    # Pad points up to a lane-dense multiple of 128 (extra columns sliced off below).
    n_pad = ((N + 127) // 128) * 128
    tn = _pick_point_tile(n_pad, B)
    x_p = jnp.pad(x, ((0, 0), (0, c_pad - c_in), (0, n_pad - N)))

    grid = (B, n_pad // tn)
    x_spec = pl.BlockSpec((1, c_pad, tn), lambda b, n: (b, 0, n))
    out_spec = pl.BlockSpec((1, emb_dims, tn), lambda b, n: (b, 0, n))
    # Constant index_maps -> weights/biases stay resident in VMEM across all steps.
    param_specs = [pl.BlockSpec(p.shape, lambda b, n: (0, 0)) for p in flat_params]

    out = pl.pallas_call(
        _pointnet_kernel,
        out_shape=jax.ShapeDtypeStruct((B, emb_dims, n_pad), jnp.float32),
        grid=grid,
        in_specs=[x_spec] + param_specs,
        out_specs=out_spec,
        compiler_params=pltpu.CompilerParams(
            dimension_semantics=("parallel", "parallel"),
            vmem_limit_bytes=32 * 1024 * 1024),
    )(x_p, *flat_params)

    return out if n_pad == N else out[:, :, :N]


def _reference_pointnet(x, params, eps=_BN_EPS):
    """Pure-JAX reference mirroring the PyTorch module (BN in eval mode)."""
    h = x
    for i in range(1, 6):
        w = params[f"conv{i}_w"]                       # (C_out, C_in)
        h = jnp.einsum("oc,bcn->bon", w, h)            # 1x1 conv, no bias
        gamma = params[f"bn{i}_gamma"][None, :, None]
        beta = params[f"bn{i}_beta"][None, :, None]
        mean = params[f"bn{i}_mean"][None, :, None]
        var = params[f"bn{i}_var"][None, :, None]
        h = gamma * (h - mean) / jnp.sqrt(var + eps) + beta
        h = jnp.maximum(h, 0.0)
    return h


def _init_params(key, emb_dims=512):
    dims = [(64, 3), (64, 64), (64, 64), (128, 64), (emb_dims, 128)]
    params = {}
    keys = jax.random.split(key, 5 * 5)
    for i, (c_out, c_in) in enumerate(dims, start=1):
        k = keys[(i - 1) * 5:(i - 1) * 5 + 5]
        bound = 1.0 / math.sqrt(c_in)  # PyTorch Conv1d default init range
        params[f"conv{i}_w"] = jax.random.uniform(
            k[0], (c_out, c_in), jnp.float32, -bound, bound)
        params[f"bn{i}_gamma"] = jax.random.uniform(k[1], (c_out,), jnp.float32, 0.5, 1.5)
        params[f"bn{i}_beta"] = 0.1 * jax.random.normal(k[2], (c_out,), jnp.float32)
        params[f"bn{i}_mean"] = 0.1 * jax.random.normal(k[3], (c_out,), jnp.float32)
        params[f"bn{i}_var"] = jax.random.uniform(k[4], (c_out,), jnp.float32, 0.5, 1.5)
    return params


if __name__ == "__main__":
    # Small shapes consistent with the module: x is (batch, 3, num_points).
    B, N, EMB = 2, 256, 512

    key = jax.random.PRNGKey(0)
    pkey, xkey = jax.random.split(key)
    params = _init_params(pkey, emb_dims=EMB)
    x = jax.random.normal(xkey, (B, 3, N), jnp.float32)

    out = pointnet_forward(x, params)
    out = jax.block_until_ready(out)

    ref = _reference_pointnet(x, params)
    assert out.shape == (B, EMB, N)
    # bf16 MXU inputs with f32 accumulation over 5 layers: allow a few % normalized error.
    err = float(jnp.max(jnp.abs(out - ref)) / (jnp.max(jnp.abs(ref)) + 1e-6))
    assert err < 5e-2, err

    # TODO(synk): BatchNorm1d is implemented in inference mode (running stats folded
    # into the 1x1 convs); training-mode batch statistics and running-stat updates are
    # stateful and not implemented in the kernel.
    print("KERNEL_OK")
</pallas_src>

<mosaic_0001>
module attributes {stable_mosaic.version = 11 : i64} {
  func.func @_pointnet_kernel(%arg0: i32, %arg1: i32, %arg2: memref<1x8x128xf32, #tpu.memory_space<vmem>>, %arg3: memref<64x8xbf16, #tpu.memory_space<vmem>>, %arg4: memref<64x1xf32, #tpu.memory_space<vmem>>, %arg5: memref<64x64xbf16, #tpu.memory_space<vmem>>, %arg6: memref<64x1xf32, #tpu.memory_space<vmem>>, %arg7: memref<64x64xbf16, #tpu.memory_space<vmem>>, %arg8: memref<64x1xf32, #tpu.memory_space<vmem>>, %arg9: memref<128x64xbf16, #tpu.memory_space<vmem>>, %arg10: memref<128x1xf32, #tpu.memory_space<vmem>>, %arg11: memref<512x128xbf16, #tpu.memory_space<vmem>>, %arg12: memref<512x1xf32, #tpu.memory_space<vmem>>, %arg13: memref<1x512x128xf32, #tpu.memory_space<vmem>>) attributes {dimension_semantics = [#tpu.dimension_semantics<parallel>, #tpu.dimension_semantics<parallel>], iteration_bounds = array<i64: 2, 2>, scalar_prefetch = 0 : i64, scratch_operands = 0 : i64, tpu.core_type = #tpu.core_type<tc>, window_params = [{transform_indices = @transform_0, window_bounds = array<i64: 1, 8, 128>}, {pipeline_mode = #tpu.pipeline_mode<synchronous>, transform_indices = @transform_1, window_bounds = array<i64: 64, 8>}, {pipeline_mode = #tpu.pipeline_mode<synchronous>, transform_indices = @transform_2, window_bounds = array<i64: 64, 1>}, {pipeline_mode = #tpu.pipeline_mode<synchronous>, transform_indices = @transform_3, window_bounds = array<i64: 64, 64>}, {pipeline_mode = #tpu.pipeline_mode<synchronous>, transform_indices = @transform_4, window_bounds = array<i64: 64, 1>}, {pipeline_mode = #tpu.pipeline_mode<synchronous>, transform_indices = @transform_5, window_bounds = array<i64: 64, 64>}, {pipeline_mode = #tpu.pipeline_mode<synchronous>, transform_indices = @transform_6, window_bounds = array<i64: 64, 1>}, {pipeline_mode = #tpu.pipeline_mode<synchronous>, transform_indices = @transform_7, window_bounds = array<i64: 128, 64>}, {pipeline_mode = #tpu.pipeline_mode<synchronous>, transform_indices = @transform_8, window_bounds = array<i64: 128, 1>}, {pipeline_mode = #tpu.pipeline_mode<synchronous>, transform_indices = @transform_9, window_bounds = array<i64: 512, 128>}, {pipeline_mode = #tpu.pipeline_mode<synchronous>, transform_indices = @transform_10, window_bounds = array<i64: 512, 1>}, {transform_indices = @transform_11, window_bounds = array<i64: 1, 512, 128>}]} {
    %c0 = arith.constant 0 : index
    %c0_0 = arith.constant 0 : index
    %c0_1 = arith.constant 0 : index
    %0 = vector.load %arg2[%c0, %c0_0, %c0_1] : memref<1x8x128xf32, #tpu.memory_space<vmem>>, vector<1x8x128xf32>
    %1 = vector.shape_cast %0 : vector<1x8x128xf32> to vector<8x128xf32>
    %2 = arith.truncf %1 : vector<8x128xf32> to vector<8x128xbf16>
    %c0_2 = arith.constant 0 : index
    %c0_3 = arith.constant 0 : index
    %3 = vector.load %arg3[%c0_2, %c0_3] : memref<64x8xbf16, #tpu.memory_space<vmem>>, vector<64x8xbf16>
    %cst = arith.constant dense<0.000000e+00> : vector<64x128xf32>
    %4 = tpu.matmul %3, %2, %cst {dimension_numbers = #tpu.dot_dimension_numbers<[1], [0], [0], [1], [0, 0, 1, 1], [], []>} : vector<64x8xbf16>, vector<8x128xbf16>, vector<64x128xf32> -> vector<64x128xf32>
    %c0_4 = arith.constant 0 : index
    %c0_5 = arith.constant 0 : index
    %5 = vector.load %arg4[%c0_4, %c0_5] : memref<64x1xf32, #tpu.memory_space<vmem>>, vector<64x1xf32>
    %6 = vector.broadcast %5 : vector<64x1xf32> to vector<64x128xf32>
    %7 = arith.addf %4, %6 : vector<64x128xf32>
    %cst_6 = arith.constant 0.000000e+00 : f32
    %8 = vector.broadcast %cst_6 : f32 to vector<64x128xf32>
    %9 = arith.maximumf %7, %8 : vector<64x128xf32>
    %10 = arith.truncf %9 : vector<64x128xf32> to vector<64x128xbf16>
    %c0_7 = arith.constant 0 : index
    %c0_8 = arith.constant 0 : index
    %11 = vector.load %arg5[%c0_7, %c0_8] : memref<64x64xbf16, #tpu.memory_space<vmem>>, vector<64x64xbf16>
    %cst_9 = arith.constant dense<0.000000e+00> : vector<64x128xf32>
    %12 = tpu.matmul %11, %10, %cst_9 {dimension_numbers = #tpu.dot_dimension_numbers<[1], [0], [0], [1], [0, 0, 1, 1], [], []>} : vector<64x64xbf16>, vector<64x128xbf16>, vector<64x128xf32> -> vector<64x128xf32>
    %c0_10 = arith.constant 0 : index
    %c0_11 = arith.constant 0 : index
    %13 = vector.load %arg6[%c0_10, %c0_11] : memref<64x1xf32, #tpu.memory_space<vmem>>, vector<64x1xf32>
    %14 = vector.broadcast %13 : vector<64x1xf32> to vector<64x128xf32>
    %15 = arith.addf %12, %14 : vector<64x128xf32>
    %cst_12 = arith.constant 0.000000e+00 : f32
    %16 = vector.broadcast %cst_12 : f32 to vector<64x128xf32>
    %17 = arith.maximumf %15, %16 : vector<64x128xf32>
    %18 = arith.truncf %17 : vector<64x128xf32> to vector<64x128xbf16>
    %c0_13 = arith.constant 0 : index
    %c0_14 = arith.constant 0 : index
    %19 = vector.load %arg7[%c0_13, %c0_14] : memref<64x64xbf16, #tpu.memory_space<vmem>>, vector<64x64xbf16>
    %cst_15 = arith.constant dense<0.000000e+00> : vector<64x128xf32>
    %20 = tpu.matmul %19, %18, %cst_15 {dimension_numbers = #tpu.dot_dimension_numbers<[1], [0], [0], [1], [0, 0, 1, 1], [], []>} : vector<64x64xbf16>, vector<64x128xbf16>, vector<64x128xf32> -> vector<64x128xf32>
    %c0_16 = arith.constant 0 : index
    %c0_17 = arith.constant 0 : index
    %21 = vector.load %arg8[%c0_16, %c0_17] : memref<64x1xf32, #tpu.memory_space<vmem>>, vector<64x1xf32>
    %22 = vector.broadcast %21 : vector<64x1xf32> to vector<64x128xf32>
    %23 = arith.addf %20, %22 : vector<64x128xf32>
    %cst_18 = arith.constant 0.000000e+00 : f32
    %24 = vector.broadcast %cst_18 : f32 to vector<64x128xf32>
    %25 = arith.maximumf %23, %24 : vector<64x128xf32>
    %26 = arith.truncf %25 : vector<64x128xf32> to vector<64x128xbf16>
    %c0_19 = arith.constant 0 : index
    %c0_20 = arith.constant 0 : index
    %27 = vector.load %arg9[%c0_19, %c0_20] : memref<128x64xbf16, #tpu.memory_space<vmem>>, vector<128x64xbf16>
    %cst_21 = arith.constant dense<0.000000e+00> : vector<128x128xf32>
    %28 = tpu.matmul %27, %26, %cst_21 {dimension_numbers = #tpu.dot_dimension_numbers<[1], [0], [0], [1], [0, 0, 1, 1], [], []>} : vector<128x64xbf16>, vector<64x128xbf16>, vector<128x128xf32> -> vector<128x128xf32>
    %c0_22 = arith.constant 0 : index
    %c0_23 = arith.constant 0 : index
    %29 = vector.load %arg10[%c0_22, %c0_23] : memref<128x1xf32, #tpu.memory_space<vmem>>, vector<128x1xf32>
    %30 = vector.broadcast %29 : vector<128x1xf32> to vector<128x128xf32>
    %31 = arith.addf %28, %30 : vector<128x128xf32>
    %cst_24 = arith.constant 0.000000e+00 : f32
    %32 = vector.broadcast %cst_24 : f32 to vector<128x128xf32>
    %33 = arith.maximumf %31, %32 : vector<128x128xf32>
    %34 = arith.truncf %33 : vector<128x128xf32> to vector<128x128xbf16>
    %c0_25 = arith.constant 0 : index
    %c0_26 = arith.constant 0 : index
    %35 = vector.load %arg11[%c0_25, %c0_26] : memref<512x128xbf16, #tpu.memory_space<vmem>>, vector<512x128xbf16>
    %cst_27 = arith.constant dense<0.000000e+00> : vector<512x128xf32>
    %36 = tpu.matmul %35, %34, %cst_27 {dimension_numbers = #tpu.dot_dimension_numbers<[1], [0], [0], [1], [0, 0, 1, 1], [], []>} : vector<512x128xbf16>, vector<128x128xbf16>, vector<512x128xf32> -> vector<512x128xf32>
    %c0_28 = arith.constant 0 : index
    %c0_29 = arith.constant 0 : index
    %37 = vector.load %arg12[%c0_28, %c0_29] : memref<512x1xf32, #tpu.memory_space<vmem>>, vector<512x1xf32>
    %38 = vector.broadcast %37 : vector<512x1xf32> to vector<512x128xf32>
    %39 = arith.addf %36, %38 : vector<512x128xf32>
    %cst_30 = arith.constant 0.000000e+00 : f32
    %40 = vector.broadcast %cst_30 : f32 to vector<512x128xf32>
    %41 = arith.maximumf %39, %40 : vector<512x128xf32>
    %c0_31 = arith.constant 0 : index
    %c0_32 = arith.constant 0 : index
    %c0_33 = arith.constant 0 : index
    %42 = vector.load %arg13[%c0_31, %c0_32, %c0_33] : memref<1x512x128xf32, #tpu.memory_space<vmem>>, vector<1x512x128xf32>
    %43 = vector.shape_cast %42 : vector<1x512x128xf32> to vector<512x128xf32>
    %44 = vector.shape_cast %41 : vector<512x128xf32> to vector<1x512x128xf32>
    tpu.vector_store %arg13[%c0_31, %c0_32, %c0_33], %44 {strides = array<i32>} : memref<1x512x128xf32, #tpu.memory_space<vmem>>, vector<1x512x128xf32>,
    return
  }
  func.func @transform_0(%arg0: i32, %arg1: i32) -> (i32, i32, i32) {
    %c0_i32 = arith.constant 0 : i32
    %c0_i32_0 = arith.constant 0 : i32
    return %arg0, %c0_i32, %arg1 : i32, i32, i32
  }
  func.func @transform_1(%arg0: i32, %arg1: i32) -> (i32, i32) {
    %c0_i32 = arith.constant 0 : i32
    %c0_i32_0 = arith.constant 0 : i32
    %c0_i32_1 = arith.constant 0 : i32
    return %c0_i32, %c0_i32_0 : i32, i32
  }
  func.func @transform_2(%arg0: i32, %arg1: i32) -> (i32, i32) {
    %c0_i32 = arith.constant 0 : i32
    %c0_i32_0 = arith.constant 0 : i32
    %c0_i32_1 = arith.constant 0 : i32
    return %c0_i32, %c0_i32_0 : i32, i32
  }
  func.func @transform_3(%arg0: i32, %arg1: i32) -> (i32, i32) {
    %c0_i32 = arith.constant 0 : i32
    %c0_i32_0 = arith.constant 0 : i32
    %c0_i32_1 = arith.constant 0 : i32
    return %c0_i32, %c0_i32_0 : i32, i32
  }
  func.func @transform_4(%arg0: i32, %arg1: i32) -> (i32, i32) {
    %c0_i32 = arith.constant 0 : i32
    %c0_i32_0 = arith.constant 0 : i32
    %c0_i32_1 = arith.constant 0 : i32
    return %c0_i32, %c0_i32_0 : i32, i32
  }
  func.func @transform_5(%arg0: i32, %arg1: i32) -> (i32, i32) {
    %c0_i32 = arith.constant 0 : i32
    %c0_i32_0 = arith.constant 0 : i32
    %c0_i32_1 = arith.constant 0 : i32
    return %c0_i32, %c0_i32_0 : i32, i32
  }
  func.func @transform_6(%arg0: i32, %arg1: i32) -> (i32, i32) {
    %c0_i32 = arith.constant 0 : i32
    %c0_i32_0 = arith.constant 0 : i32
    %c0_i32_1 = arith.constant 0 : i32
    return %c0_i32, %c0_i32_0 : i32, i32
  }
  func.func @transform_7(%arg0: i32, %arg1: i32) -> (i32, i32) {
    %c0_i32 = arith.constant 0 : i32
    %c0_i32_0 = arith.constant 0 : i32
    %c0_i32_1 = arith.constant 0 : i32
    return %c0_i32, %c0_i32_0 : i32, i32
  }
  func.func @transform_8(%arg0: i32, %arg1: i32) -> (i32, i32) {
    %c0_i32 = arith.constant 0 : i32
    %c0_i32_0 = arith.constant 0 : i32
    %c0_i32_1 = arith.constant 0 : i32
    return %c0_i32, %c0_i32_0 : i32, i32
  }
  func.func @transform_9(%arg0: i32, %arg1: i32) -> (i32, i32) {
    %c0_i32 = arith.constant 0 : i32
    %c0_i32_0 = arith.constant 0 : i32
    %c0_i32_1 = arith.constant 0 : i32
    return %c0_i32, %c0_i32_0 : i32, i32
  }
  func.func @transform_10(%arg0: i32, %arg1: i32) -> (i32, i32) {
    %c0_i32 = arith.constant 0 : i32
    %c0_i32_0 = arith.constant 0 : i32
    %c0_i32_1 = arith.constant 0 : i32
    return %c0_i32, %c0_i32_0 : i32, i32
  }
  func.func @transform_11(%arg0: i32, %arg1: i32) -> (i32, i32, i32) {
    %c0_i32 = arith.constant 0 : i32
    %c0_i32_0 = arith.constant 0 : i32
    return %arg0, %c0_i32, %arg1 : i32, i32, i32
  }
}

</mosaic_0001>

<llo_original>
// kernel: tpu_custom_call.1
$region0: #{tpu_custom_call.1}
  #allocation0 [shape = 'u32[]', space=smem, size = 0x4, offset = 0x4, fixed_abs, tag = 'smem constant byte address 0x4 - core index']
  #allocation1 [shape = 'u32[144,128]{1,0:T(1,128)}', space=vmem, size = 0x12000, scoped, tag = 'internal scratch']
  %s0 = inlined_call_operand.vmem [shape: f32[2,8,256], index: 0, kind: input, shape index: {}]
  %s1 = inlined_call_operand.vmem [shape: bf16[64,8], index: 1, kind: input, shape index: {}]
  %s2 = inlined_call_operand.vmem [shape: f32[64,1], index: 2, kind: input, shape index: {}]
  %s3 = inlined_call_operand.vmem [shape: bf16[64,64], index: 3, kind: input, shape index: {}]
  %s4 = inlined_call_operand.vmem [shape: f32[64,1], index: 4, kind: input, shape index: {}]
  %s5 = inlined_call_operand.vmem [shape: bf16[64,64], index: 5, kind: input, shape index: {}]
  %s6 = inlined_call_operand.vmem [shape: f32[64,1], index: 6, kind: input, shape index: {}]
  %s7 = inlined_call_operand.vmem [shape: bf16[128,64], index: 7, kind: input, shape index: {}]
  %s8 = inlined_call_operand.vmem [shape: f32[128,1], index: 8, kind: input, shape index: {}]
  %s9 = inlined_call_operand.vmem [shape: bf16[512,128], index: 9, kind: input, shape index: {}]
  %s10 = inlined_call_operand.vmem [shape: f32[512,1], index: 10, kind: input, shape index: {}]
  %s11 = inlined_call_operand.hbm [shape: f32[2,512,256], index: 11, kind: output, shape index: {}]
  %s12 = sld [smem:[#allocation0]]
  $region77: #{tpu_custom_call.1} parent=0
    _
  %s14 = ssub.s32 1, %s12
  %s15 = scalar_select 0, %s14, %s12
  $region1: #{tpu_custom_call.1} parent=0
    #allocation2 [shape = 'u8[524288]{0}', space=vmem, size = 0x80000, scoped, tag = 'output window, operand 0']
    #allocation3 [shape = 's32[2]{0}', space=sflag, size = 0x8, scoped, tag = 'scoped memory for tpu_custom_call.1']
    %16 = vsyncpa [#allocation3], 0
    %s17 = scalar_lea.sflag [#allocation3], 1
    %18 = vsyncpa %s17, 0
    loop: start=0, step=1, limit=6
    $region2: #{tpu_custom_call.1} parent=1 // loop_pre_header
      _
    $region3: #{tpu_custom_call.1} parent=1 // loop_header
      %s20 = sphi 0, %s24
      %p21 = scmp.ge.s32.totalorder %s20, 6
      %s27 = sphi 0, %s39
      %s28 = sphi 0, %s35
      %s29 = sphi 0, %s27
      %s30 = sphi 0, %s28
      %s31 = sphi 0, %s29
      %s32 = sphi 0, %s30
      %s44 = sphi 0, %s46
      %s47 = sphi 0, %s44
      %s48 = sphi 0, %s47
      %s64 = sphi 0, %s48
      %s68 = sphi 0, %s68
      %s70 = sphi 0, %s68
      %s71 = sphi 0, %s70
      %s85 = sphi 0, %s71
      %s89 = sphi 0, %s89
      %s91 = sphi 0, %s89
      %s92 = sphi 0, %s91
      %s106 = sphi 0, %s92
      %s110 = sphi 0, %s110
      %s112 = sphi 0, %s110
      %s113 = sphi 0, %s112
      %s127 = sphi 0, %s113
      %s131 = sphi 0, %s131
      %s133 = sphi 0, %s131
      %s134 = sphi 0, %s133
      %s148 = sphi 0, %s134
      %s152 = sphi 0, %s152
      %s154 = sphi 0, %s152
      %s155 = sphi 0, %s154
      %s169 = sphi 0, %s155
      %s173 = sphi 0, %s173
      %s175 = sphi 0, %s173
      %s176 = sphi 0, %s175
      %s190 = sphi 0, %s176
      %s194 = sphi 0, %s194
      %s196 = sphi 0, %s194
      %s197 = sphi 0, %s196
      %s211 = sphi 0, %s197
      %s215 = sphi 0, %s215
      %s217 = sphi 0, %s215
      %s218 = sphi 0, %s217
      %s232 = sphi 0, %s218
      %s236 = sphi 0, %s236
      %s238 = sphi 0, %s236
      %s239 = sphi 0, %s238
      %s253 = sphi 0, %s239
      %s257 = sphi 0, %s257
      %s259 = sphi 0, %s257
      %s260 = sphi 0, %s259
      %s274 = sphi 0, %s260
      %s282 = sphi 0, %s284
      %s285 = sphi 0, %s282
      %s286 = sphi 0, %s285
      %s302 = sphi 0, %s286
    $region4: #{tpu_custom_call.1} parent=1 // loop_header_branch
      %23 = sbr.rel (%p21) target = $region8
    $region5: #{tpu_custom_call.1} parent=1 // loop_body
      %s25 = ssub.s32 %s20, 1
      %s26 = ssub.s32 %s20, 2
      %s33 = sadd.s32 1, %s28
      %p34 = scmp.ge.s32.totalorder %s33, 2
      %s35 = scalar_select %p34, 0, %s33
      %s36 = sadd.s32 1, %s27
      %s37 = scalar_select %p34, %s36, %s27
      %p38 = scmp.ge.s32.totalorder %s37, 2
      %s39 = scalar_select %p38, 0, %s37
      %s40 = ssub.s32 %s27, %s39
      %s41 = ssub.s32 %s28, %s35
      %s42 = sor.u32 %s40, %s41
      %p43 = scmp.eq.s32.totalorder %s42, 0
      %s45 = sadd.s32 %s44, 1
      %s46 = scalar_select %p43, %s44, %s45
      %p49 = pneg %p43
      %p50 = scmp.eq.s32.totalorder %s20, 3
      %p51 = por %p49, %p50
      %p52 = scmp.ne.s32.totalorder %s44, %s47
      %p53 = scmp.eq.s32.totalorder %s20, 0
      %p54 = por %p52, %p53
      %p55 = scmp.ne.s32.totalorder %s44, %s47
      %p56 = scmp.eq.s32.totalorder %s25, 3
      %p57 = por %p55, %p56
      %p58 = scmp.ne.s32.totalorder %s47, %s48
      %p59 = scmp.eq.s32.totalorder %s25, 0
      %p60 = por %p58, %p59
      %p61 = scmp.ne.s32.totalorder %s47, %s48
      %p62 = scmp.eq.s32.totalorder %s26, 3
      %p63 = por %p61, %p62
      %p65 = scmp.ne.s32.totalorder %s48, %s64
      %p66 = scmp.eq.s32.totalorder %s26, 0
      %p67 = por %p65, %p66
      %s69 = sadd.s32 %s68, 1
      %p72 = scmp.eq.s32.totalorder %s20, 3
      %p73 = scmp.ne.s32.totalorder %s68, %s70
      %p74 = scmp.eq.s32.totalorder %s20, 0
      %p75 = por %p73, %p74
      %p76 = scmp.ne.s32.totalorder %s68, %s70
      %p77 = scmp.eq.s32.totalorder %s25, 3
      %p78 = por %p76, %p77
      %p79 = scmp.ne.s32.totalorder %s70, %s71
      %p80 = scmp.eq.s32.totalorder %s25, 0
      %p81 = por %p79, %p80
      %p82 = scmp.ne.s32.totalorder %s70, %s71
      %p83 = scmp.eq.s32.totalorder %s26, 3
      %p84 = por %p82, %p83
      %p86 = scmp.ne.s32.totalorder %s71, %s85
      %p87 = scmp.eq.s32.totalorder %s26, 0
      %p88 = por %p86, %p87
      %s90 = sadd.s32 %s89, 1
      %p93 = scmp.eq.s32.totalorder %s20, 3
      %p94 = scmp.ne.s32.totalorder %s89, %s91
      %p95 = scmp.eq.s32.totalorder %s20, 0
      %p96 = por %p94, %p95
      %p97 = scmp.ne.s32.totalorder %s89, %s91
      %p98 = scmp.eq.s32.totalorder %s25, 3
      %p99 = por %p97, %p98
      %p100 = scmp.ne.s32.totalorder %s91, %s92
      %p101 = scmp.eq.s32.totalorder %s25, 0
      %p102 = por %p100, %p101
      %p103 = scmp.ne.s32.totalorder %s91, %s92
      %p104 = scmp.eq.s32.totalorder %s26, 3
      %p105 = por %p103, %p104
      %p107 = scmp.ne.s32.totalorder %s92, %s106
      %p108 = scmp.eq.s32.totalorder %s26, 0
      %p109 = por %p107, %p108
      %s111 = sadd.s32 %s110, 1
      %p114 = scmp.eq.s32.totalorder %s20, 3
      %p115 = scmp.ne.s32.totalorder %s110, %s112
      %p116 = scmp.eq.s32.totalorder %s20, 0
      %p117 = por %p115, %p116
      %p118 = scmp.ne.s32.totalorder %s110, %s112
      %p119 = scmp.eq.s32.totalorder %s25, 3
      %p120 = por %p118, %p119
      %p121 = scmp.ne.s32.totalorder %s112, %s113
      %p122 = scmp.eq.s32.totalorder %s25, 0
      %p123 = por %p121, %p122
      %p124 = scmp.ne.s32.totalorder %s112, %s113
      %p125 = scmp.eq.s32.totalorder %s26, 3
      %p126 = por %p124, %p125
      %p128 = scmp.ne.s32.totalorder %s113, %s127
      %p129 = scmp.eq.s32.totalorder %s26, 0
      %p130 = por %p128, %p129
      %s132 = sadd.s32 %s131, 1
      %p135 = scmp.eq.s32.totalorder %s20, 3
      %p136 = scmp.ne.s32.totalorder %s131, %s133
      %p137 = scmp.eq.s32.totalorder %s20, 0
      %p138 = por %p136, %p137
      %p139 = scmp.ne.s32.totalorder %s131, %s133
      %p140 = scmp.eq.s32.totalorder %s25, 3
      %p141 = por %p139, %p140
      %p142 = scmp.ne.s32.totalorder %s133, %s134
      %p143 = scmp.eq.s32.totalorder %s25, 0
      %p144 = por %p142, %p143
      %p145 = scmp.ne.s32.totalorder %s133, %s134
      %p146 = scmp.eq.s32.totalorder %s26, 3
      %p147 = por %p145, %p146
      %p149 = scmp.ne.s32.totalorder %s134, %s148
      %p150 = scmp.eq.s32.totalorder %s26, 0
      %p151 = por %p149, %p150
      %s153 = sadd.s32 %s152, 1
      %p156 = scmp.eq.s32.totalorder %s20, 3
      %p157 = scmp.ne.s32.totalorder %s152, %s154
      %p158 = scmp.eq.s32.totalorder %s20, 0
      %p159 = por %p157, %p158
      %p160 = scmp.ne.s32.totalorder %s152, %s154
      %p161 = scmp.eq.s32.totalorder %s25, 3
      %p162 = por %p160, %p161
      %p163 = scmp.ne.s32.totalorder %s154, %s155
      %p164 = scmp.eq.s32.totalorder %s25, 0
      %p165 = por %p163, %p164
      %p166 = scmp.ne.s32.totalorder %s154, %s155
      %p167 = scmp.eq.s32.totalorder %s26, 3
      %p168 = por %p166, %p167
      %p170 = scmp.ne.s32.totalorder %s155, %s169
      %p171 = scmp.eq.s32.totalorder %s26, 0
      %p172 = por %p170, %p171
      %s174 = sadd.s32 %s173, 1
      %p177 = scmp.eq.s32.totalorder %s20, 3
      %p178 = scmp.ne.s32.totalorder %s173, %s175
      %p179 = scmp.eq.s32.totalorder %s20, 0
      %p180 = por %p178, %p179
      %p181 = scmp.ne.s32.totalorder %s173, %s175
      %p182 = scmp.eq.s32.totalorder %s25, 3
      %p183 = por %p181, %p182
      %p184 = scmp.ne.s32.totalorder %s175, %s176
      %p185 = scmp.eq.s32.totalorder %s25, 0
      %p186 = por %p184, %p185
      %p187 = scmp.ne.s32.totalorder %s175, %s176
      %p188 = scmp.eq.s32.totalorder %s26, 3
      %p189 = por %p187, %p188
      %p191 = scmp.ne.s32.totalorder %s176, %s190
      %p192 = scmp.eq.s32.totalorder %s26, 0
      %p193 = por %p191, %p192
      %s195 = sadd.s32 %s194, 1
      %p198 = scmp.eq.s32.totalorder %s20, 3
      %p199 = scmp.ne.s32.totalorder %s194, %s196
      %p200 = scmp.eq.s32.totalorder %s20, 0
      %p201 = por %p199, %p200
      %p202 = scmp.ne.s32.totalorder %s194, %s196
      %p203 = scmp.eq.s32.totalorder %s25, 3
      %p204 = por %p202, %p203
      %p205 = scmp.ne.s32.totalorder %s196, %s197
      %p206 = scmp.eq.s32.totalorder %s25, 0
      %p207 = por %p205, %p206
      %p208 = scmp.ne.s32.totalorder %s196, %s197
      %p209 = scmp.eq.s32.totalorder %s26, 3
      %p210 = por %p208, %p209
      %p212 = scmp.ne.s32.totalorder %s197, %s211
      %p213 = scmp.eq.s32.totalorder %s26, 0
      %p214 = por %p212, %p213
      %s216 = sadd.s32 %s215, 1
      %p219 = scmp.eq.s32.totalorder %s20, 3
      %p220 = scmp.ne.s32.totalorder %s215, %s217
      %p221 = scmp.eq.s32.totalorder %s20, 0
      %p222 = por %p220, %p221
      %p223 = scmp.ne.s32.totalorder %s215, %s217
      %p224 = scmp.eq.s32.totalorder %s25, 3
      %p225 = por %p223, %p224
      %p226 = scmp.ne.s32.totalorder %s217, %s218
      %p227 = scmp.eq.s32.totalorder %s25, 0
      %p228 = por %p226, %p227
      %p229 = scmp.ne.s32.totalorder %s217, %s218
      %p230 = scmp.eq.s32.totalorder %s26, 3
      %p231 = por %p229, %p230
      %p233 = scmp.ne.s32.totalorder %s218, %s232
      %p234 = scmp.eq.s32.totalorder %s26, 0
      %p235 = por %p233, %p234
      %s237 = sadd.s32 %s236, 1
      %p240 = scmp.eq.s32.totalorder %s20, 3
      %p241 = scmp.ne.s32.totalorder %s236, %s238
      %p242 = scmp.eq.s32.totalorder %s20, 0
      %p243 = por %p241, %p242
      %p244 = scmp.ne.s32.totalorder %s236, %s238
      %p245 = scmp.eq.s32.totalorder %s25, 3
      %p246 = por %p244, %p245
      %p247 = scmp.ne.s32.totalorder %s238, %s239
      %p248 = scmp.eq.s32.totalorder %s25, 0
      %p249 = por %p247, %p248
      %p250 = scmp.ne.s32.totalorder %s238, %s239
      %p251 = scmp.eq.s32.totalorder %s26, 3
      %p252 = por %p250, %p251
      %p254 = scmp.ne.s32.totalorder %s239, %s253
      %p255 = scmp.eq.s32.totalorder %s26, 0
      %p256 = por %p254, %p255
      %s258 = sadd.s32 %s257, 1
      %p261 = scmp.eq.s32.totalorder %s20, 3
      %p262 = scmp.ne.s32.totalorder %s257, %s259
      %p263 = scmp.eq.s32.totalorder %s20, 0
      %p264 = por %p262, %p263
      %p265 = scmp.ne.s32.totalorder %s257, %s259
      %p266 = scmp.eq.s32.totalorder %s25, 3
      %p267 = por %p265, %p266
      %p268 = scmp.ne.s32.totalorder %s259, %s260
      %p269 = scmp.eq.s32.totalorder %s25, 0
      %p270 = por %p268, %p269
      %p271 = scmp.ne.s32.totalorder %s259, %s260
      %p272 = scmp.eq.s32.totalorder %s26, 3
      %p273 = por %p271, %p272
      %p275 = scmp.ne.s32.totalorder %s260, %s274
      %p276 = scmp.eq.s32.totalorder %s26, 0
      %p277 = por %p275, %p276
      %s278 = ssub.s32 %s27, %s39
      %s279 = ssub.s32 %s28, %s35
      %s280 = sor.u32 %s278, %s279
      %p281 = scmp.eq.s32.totalorder %s280, 0
      %s283 = sadd.s32 %s282, 1
      %s284 = scalar_select %p281, %s282, %s283
      %p287 = pneg %p281
      %p288 = scmp.eq.s32.totalorder %s20, 3
      %p289 = por %p287, %p288
      %p290 = scmp.ne.s32.totalorder %s282, %s285
      %p291 = scmp.eq.s32.totalorder %s20, 0
      %p292 = por %p290, %p291
      %p293 = scmp.ne.s32.totalorder %s282, %s285
      %p294 = scmp.eq.s32.totalorder %s25, 3
      %p295 = por %p293, %p294
      %p296 = scmp.ne.s32.totalorder %s285, %s286
      %p297 = scmp.eq.s32.totalorder %s25, 0
      %p298 = por %p296, %p297
      %p299 = scmp.ne.s32.totalorder %s285, %s286
      %p300 = scmp.eq.s32.totalorder %s26, 3
      %p301 = por %p299, %p300
      %p303 = scmp.ne.s32.totalorder %s286, %s302
      %p304 = scmp.eq.s32.totalorder %s26, 0
      %p305 = por %p303, %p304
      %p306 = scmp.le.s32.totalorder 1, %s20
      %p307 = scmp.lt.s32.totalorder %s20, 5
      %p308 = pnand %p306, %p307
      %p309 = pneg %p308
      // Predicated region
      $region9: #{tpu_custom_call.1} parent=5 // pred_check
        _
      $region10: #{tpu_custom_call.1} parent=5 // pred_check_branch
        %311 = sbr.rel (%p308) target = $region12
      $region11: #{tpu_custom_call.1} parent=5 // pred_region
        %s312 = ssub.s32 %s20, 1
        // Predicated region
        $region13: #{tpu_custom_call.1} parent=11 // pred_check
          %p313 = pneg %p81
        $region14: #{tpu_custom_call.1} parent=11 // pred_check_branch
          %315 = sbr.rel (%p313) target = $region16
        $region15: #{tpu_custom_call.1} parent=11 // pred_region
          _
        $region16: #{tpu_custom_call.1} parent=11 // pred_fallthru
          _
        // Predicated region
        $region17: #{tpu_custom_call.1} parent=11 // pred_check
          %p316 = pneg %p102
        $region18: #{tpu_custom_call.1} parent=11 // pred_check_branch
          %318 = sbr.rel (%p316) target = $region20
        $region19: #{tpu_custom_call.1} parent=11 // pred_region
          _
        $region20: #{tpu_custom_call.1} parent=11 // pred_fallthru
          _
        // Predicated region
        $region21: #{tpu_custom_call.1} parent=11 // pred_check
          %p319 = pneg %p123
        $region22: #{tpu_custom_call.1} parent=11 // pred_check_branch
          %321 = sbr.rel (%p319) target = $region24
        $region23: #{tpu_custom_call.1} parent=11 // pred_region
          _
        $region24: #{tpu_custom_call.1} parent=11 // pred_fallthru
          _
        // Predicated region
        $region25: #{tpu_custom_call.1} parent=11 // pred_check
          %p322 = pneg %p144
        $region26: #{tpu_custom_call.1} parent=11 // pred_check_branch
          %324 = sbr.rel (%p322) target = $region28
        $region27: #{tpu_custom_call.1} parent=11 // pred_region
          _
        $region28: #{tpu_custom_call.1} parent=11 // pred_fallthru
          _
        // Predicated region
        $region29: #{tpu_custom_call.1} parent=11 // pred_check
          %p325 = pneg %p165
        $region30: #{tpu_custom_call.1} parent=11 // pred_check_branch
          %327 = sbr.rel (%p325) target = $region32
        $region31: #{tpu_custom_call.1} parent=11 // pred_region
          _
        $region32: #{tpu_custom_call.1} parent=11 // pred_fallthru
          _
        // Predicated region
        $region33: #{tpu_custom_call.1} parent=11 // pred_check
          %p328 = pneg %p186
        $region34: #{tpu_custom_call.1} parent=11 // pred_check_branch
          %330 = sbr.rel (%p328) target = $region36
        $region35: #{tpu_custom_call.1} parent=11 // pred_region
          _
        $region36: #{tpu_custom_call.1} parent=11 // pred_fallthru
          _
        // Predicated region
        $region37: #{tpu_custom_call.1} parent=11 // pred_check
          %p331 = pneg %p207
        $region38: #{tpu_custom_call.1} parent=11 // pred_check_branch
          %333 = sbr.rel (%p331) target = $region40
        $region39: #{tpu_custom_call.1} parent=11 // pred_region
          _
        $region40: #{tpu_custom_call.1} parent=11 // pred_fallthru
          _
        // Predicated region
        $region41: #{tpu_custom_call.1} parent=11 // pred_check
          %p334 = pneg %p228
        $region42: #{tpu_custom_call.1} parent=11 // pred_check_branch
          %336 = sbr.rel (%p334) target = $region44
        $region43: #{tpu_custom_call.1} parent=11 // pred_region
          _
        $region44: #{tpu_custom_call.1} parent=11 // pred_fallthru
          _
        // Predicated region
        $region45: #{tpu_custom_call.1} parent=11 // pred_check
          %p337 = pneg %p249
        $region46: #{tpu_custom_call.1} parent=11 // pred_check_branch
          %339 = sbr.rel (%p337) target = $region48
        $region47: #{tpu_custom_call.1} parent=11 // pred_region
          _
        $region48: #{tpu_custom_call.1} parent=11 // pred_fallthru
          _
        // Predicated region
        $region49: #{tpu_custom_call.1} parent=11 // pred_check
          %p340 = pneg %p270
        $region50: #{tpu_custom_call.1} parent=11 // pred_check_branch
          %342 = sbr.rel (%p340) target = $region52
        $region51: #{tpu_custom_call.1} parent=11 // pred_region
          _
        $region52: #{tpu_custom_call.1} parent=11 // pred_fallthru
          _
      $region12: #{tpu_custom_call.1} parent=5 // pred_fallthru
        _
      %p343 = scmp.lt.s32.totalorder %s20, 4
      // Predicated region
      $region53: #{tpu_custom_call.1} parent=5 // pred_check
        %p344 = pneg %p343
      $region54: #{tpu_custom_call.1} parent=5 // pred_check_branch
        %346 = sbr.rel (%p344) target = $region56
      $region55: #{tpu_custom_call.1} parent=5 // pred_region
        // Predicated region
        $region57: #{tpu_custom_call.1} parent=55 // pred_check
          %p347 = pneg %p54
        $region58: #{tpu_custom_call.1} parent=55 // pred_check_branch
          %349 = sbr.rel (%p347) target = $region60
        $region59: #{tpu_custom_call.1} parent=55 // pred_region
          %p350 = scmp.lt.s32.totalorder %s27, 1
          %s351 = scalar_select %p350, %s27, 1
          %p352 = scmp.lt.s32.totalorder %s28, 1
          %s353 = scalar_select %p352, %s28, 1
          %s354 = smul.addr %s351, 2
          %s355 = sadd.s32 %s353, %s354
          %s356 = smul.addr %s355, 8
          %s357 = scalar_lea.vmem %s0, %s356
        $region60: #{tpu_custom_call.1} parent=55 // pred_fallthru
          _
      $region56: #{tpu_custom_call.1} parent=5 // pred_fallthru
        _
      %p358 = scmp.le.s32.totalorder 1, %s20
      %p359 = scmp.lt.s32.totalorder %s20, 5
      %p360 = pnand %p358, %p359
      %p361 = pneg %p360
      // Predicated region
      $region61: #{tpu_custom_call.1} parent=5 // pred_check
        _
      $region62: #{tpu_custom_call.1} parent=5 // pred_check_branch
        %363 = sbr.rel (%p360) target = $region64
      $region63: #{tpu_custom_call.1} parent=5 // pred_region
        %s364 = ssub.s32 %s20, 1
        %p365 = scmp.lt.s32.totalorder %s29, 1
        %s366 = scalar_select %p365, %s29, 1
        %p367 = scmp.lt.s32.totalorder %s30, 1
        %s368 = scalar_select %p367, %s30, 1
        %s369 = smul.addr %s366, 2
        %s370 = sadd.s32 %s368, %s369
        %s371 = smul.addr %s370, 8
        %s372 = scalar_lea.vmem %s0, %s371
        %p373 = pneg %p60
        %p374 = pneg %p57
        %p375 = pneg %p81
        %p376 = pneg %p78
        %p377 = pneg %p102
        %p378 = pneg %p99
        %p379 = pneg %p123
        %p380 = pneg %p120
        %p381 = pneg %p144
        %p382 = pneg %p141
        %p383 = pneg %p165
        %p384 = pneg %p162
        %p385 = pneg %p186
        %p386 = pneg %p183
        %p387 = pneg %p207
        %p388 = pneg %p204
        %p389 = pneg %p228
        %p390 = pneg %p225
        %p391 = pneg %p249
        %p392 = pneg %p246
        %p393 = pneg %p270
        %p394 = pneg %p267
        %p395 = pneg %p298
        %p396 = pneg %p295
        %s397 = sand.u32 %s285, 1
        %s398 = scalar_lea.sflag [#allocation3], %s397
        %s399 = sand.u32 %s285, 1
        %s400 = smul.addr %s399, 512
        %s401 = scalar_lea.vmem [#allocation2], %s400
        %p402 = scmp.lt.s32.totalorder %s29, 1
        %s403 = scalar_select %p402, %s29, 1
        %p404 = scmp.lt.s32.totalorder %s30, 1
        %s405 = scalar_select %p404, %s30, 1
        %s406 = smul.addr %s403, 2
        %s407 = sadd.s32 %s405, %s406
        %s408 = smul.addr %s407, 8
        %s409 = scalar_lea.vmem %s0, %s408
        %v411 = vld [vmem:[%s409] sm:$0xff]
        %v412 = vpack.c.bf16 %v411, %v411
        %v413 = vld [vmem:[%s1] sm:$0xf]
        %v414 = vld [vmem:[%s1 + $0x4] sm:$0xf]
        %v415 = vld [vmem:[%s1 + $0x8] sm:$0xf]
        %v416 = vld [vmem:[%s1 + $0xc] sm:$0xf]
        %v417 = vld [vmem:[%s1 + $0x10] sm:$0xf]
        %v418 = vld [vmem:[%s1 + $0x14] sm:$0xf]
        %v419 = vld [vmem:[%s1 + $0x18] sm:$0xf]
        %v420 = vld [vmem:[%s1 + $0x1c] sm:$0xf]
        %v421 = vld [vmem:[%s2] sm:$0xff]
        %v422 = vld [vmem:[%s2 + $0x8] sm:$0xff]
        %v423 = vld [vmem:[%s2 + $0x10] sm:$0xff]
        %v424 = vld [vmem:[%s2 + $0x18] sm:$0xff]
        %v425 = vld [vmem:[%s2 + $0x20] sm:$0xff]
        %v426 = vld [vmem:[%s2 + $0x28] sm:$0xff]
        %v427 = vld [vmem:[%s2 + $0x30] sm:$0xff]
        %v428 = vld [vmem:[%s2 + $0x38] sm:$0xff]
        %430 = vset.pattern.permute.xlu0 0
        %431 = vperm.xlu0 %430, %v421
        %v432 = vpop.permute.xlu0 %431
        %435 = vset.pattern.permute.xlu0 0
        %436 = vperm.xlu0 %435, %v422
        %v437 = vpop.permute.xlu0 %436
        %440 = vset.pattern.permute.xlu0 0
        %441 = vperm.xlu0 %440, %v423
        %v442 = vpop.permute.xlu0 %441
        %445 = vset.pattern.permute.xlu0 0
        %446 = vperm.xlu0 %445, %v424
        %v447 = vpop.permute.xlu0 %446
        %450 = vset.pattern.permute.xlu0 0
        %451 = vperm.xlu0 %450, %v425
        %v452 = vpop.permute.xlu0 %451
        %455 = vset.pattern.permute.xlu0 0
        %456 = vperm.xlu0 %455, %v426
        %v457 = vpop.permute.xlu0 %456
        %460 = vset.pattern.permute.xlu0 0
        %461 = vperm.xlu0 %460, %v427
        %v462 = vpop.permute.xlu0 %461
        %465 = vset.pattern.permute.xlu0 0
        %466 = vperm.xlu0 %465, %v428
        %v467 = vpop.permute.xlu0 %466
        %v477 = vunpack.c.l.b16 %v413
        %v478 = vunpack.c.l.b16 %v414
        %v479 = vunpack.c.l.b16 %v415
        %v480 = vunpack.c.l.b16 %v416
        %v481 = vunpack.c.l.b16 %v417
        %v482 = vunpack.c.l.b16 %v418
        %v483 = vunpack.c.l.b16 %v419
        %v484 = vunpack.c.l.b16 %v420
        %v485 = vpack.c.b16 %v478, %v477
        %v486 = vpack.c.b16 %v480, %v479
        %v487 = vpack.c.b16 %v482, %v481
        %v488 = vpack.c.b16 %v484, %v483
        %vm489 = vcmask 64512
        %v491 = vsel %vm489, %v485, 0
        %v494 = vsel %vm489, %v486, 0
        %v497 = vsel %vm489, %v487, 0
        %v500 = vsel %vm489, %v488, 0
        %vm502 = vcmask 1043456
        %v504 = vsel %vm502, %v412, 0
        %506 = vmatprep.subr.bf16.mxu0 0
        %507 = vmatpush1.bf16.msra.mxu0 %v504
        %508 = vmatprep.subr.bf16.mxu0 0
        %509 = vmatpush1.bf16.msra.mxu0 0
        %510 = vmatprep.subr.bf16.mxu0 0
        %511 = vmatpush1.bf16.msra.mxu0 0
        %512 = vmatprep.subr.bf16.mxu0 0
        %513 = vmatpush1.bf16.msra.mxu0 0
        %514 = vmatprep.subr.bf16.mxu0 0
        %515 = vmatpush1.bf16.msra.mxu0 0
        %516 = vmatprep.subr.bf16.mxu0 0
        %517 = vmatpush1.bf16.msra.mxu0 0
        %518 = vmatprep.subr.bf16.mxu0 0
        %519 = vmatpush1.bf16.msra.mxu0 0
        %520 = vmatprep.subr.bf16.mxu0 0
        %521 = vmatpush1.bf16.msra.mxu0 0
        %522 = vmatprep.subr.bf16.mxu0 0
        %523 = vmatpush1.bf16.msra.mxu0 0
        %524 = vmatprep.subr.bf16.mxu0 0
        %525 = vmatpush1.bf16.msra.mxu0 0
        %526 = vmatprep.subr.bf16.mxu0 0
        %527 = vmatpush1.bf16.msra.mxu0 0
        %528 = vmatprep.subr.bf16.mxu0 0
        %529 = vmatpush1.bf16.msra.mxu0 0
        %530 = vmatprep.subr.bf16.mxu0 0
        %531 = vmatpush1.bf16.msra.mxu0 0
        %532 = vmatprep.subr.bf16.mxu0 0
        %533 = vmatpush1.bf16.msra.mxu0 0
        %534 = vmatprep.subr.bf16.mxu0 0
        %535 = vmatpush1.bf16.msra.mxu0 0
        %536 = vmatprep.subr.bf16.mxu0 0
        %537 = vmatpush1.bf16.msra.mxu0 0
        %538 = vmatprep.mubr.bf16.mxu0 0
        %539 = vmatmul.mubr.bf16.gmra.mrb[0].mxu0 %v491
        %v540 = vpop.f32.mrb[0].mxu0
        %v541 = vadd.f32 %v432, %v540
        %v542 = vpop.f32.mrb[0].mxu0
        %v543 = vpop.f32.mrb[0].mxu0
        %v544 = vadd.f32 %v437, %v543
        %v545 = vpop.f32.mrb[0].mxu0
        %546 = vmatprep.mubr.bf16.mxu0 0
        %547 = vmatmul.mubr.bf16.gmra.mrb[0].mxu0 %v494
        %v548 = vpop.f32.mrb[0].mxu0
        %v549 = vadd.f32 %v442, %v548
        %v550 = vpop.f32.mrb[0].mxu0
        %v551 = vpop.f32.mrb[0].mxu0
        %v552 = vadd.f32 %v447, %v551
        %v553 = vpop.f32.mrb[0].mxu0
        %554 = vmatprep.mubr.bf16.mxu0 0
        %555 = vmatmul.mubr.bf16.gmra.mrb[0].mxu0 %v497
        %v556 = vpop.f32.mrb[0].mxu0
        %v557 = vadd.f32 %v452, %v556
        %v558 = vpop.f32.mrb[0].mxu0
        %v559 = vpop.f32.mrb[0].mxu0
        %v560 = vadd.f32 %v457, %v559
        %v561 = vpop.f32.mrb[0].mxu0
        %562 = vmatprep.mubr.bf16.mxu0 0
        %563 = vmatmul.mubr.bf16.gmra.mrb[0].mxu0 %v500
        %v564 = vpop.f32.mrb[0].mxu0
        %v565 = vadd.f32 %v462, %v564
        %v566 = vpop.f32.mrb[0].mxu0
        %v567 = vpop.f32.mrb[0].mxu0
        %v568 = vadd.f32 %v467, %v567
        %v569 = vpop.f32.mrb[0].mxu0
        %570 = vdwg.mxu0
        %v571 = vmax.f32 %v541, 0.0
        %v572 = vmax.f32 %v544, 0.0
        %v573 = vmax.f32 %v549, 0.0
        %v574 = vmax.f32 %v552, 0.0
        %v575 = vmax.f32 %v557, 0.0
        %v576 = vmax.f32 %v560, 0.0
        %v577 = vmax.f32 %v565, 0.0
        %v578 = vmax.f32 %v568, 0.0
        %v579 = vpack.c.bf16 %v572, %v571
        %v580 = vpack.c.bf16 %v574, %v573
        %v581 = vpack.c.bf16 %v576, %v575
        %v582 = vpack.c.bf16 %v578, %v577
        %v583 = vld [vmem:[%s3] sm:$0xf]
        %v584 = vld [vmem:[%s3 + $0x4] sm:$0xf]
        %v585 = vld [vmem:[%s3 + $0x8] sm:$0xf]
        %v586 = vld [vmem:[%s3 + $0xc] sm:$0xf]
        %v587 = vld [vmem:[%s3 + $0x10] sm:$0xf]
        %v588 = vld [vmem:[%s3 + $0x14] sm:$0xf]
        %v589 = vld [vmem:[%s3 + $0x18] sm:$0xf]
        %v590 = vld [vmem:[%s3 + $0x1c] sm:$0xf]
        %v591 = vld [vmem:[%s4] sm:$0xff]
        %v592 = vld [vmem:[%s4 + $0x8] sm:$0xff]
        %v593 = vld [vmem:[%s4 + $0x10] sm:$0xff]
        %v594 = vld [vmem:[%s4 + $0x18] sm:$0xff]
        %v595 = vld [vmem:[%s4 + $0x20] sm:$0xff]
        %v596 = vld [vmem:[%s4 + $0x28] sm:$0xff]
        %v597 = vld [vmem:[%s4 + $0x30] sm:$0xff]
        %v598 = vld [vmem:[%s4 + $0x38] sm:$0xff]
        %600 = vset.pattern.permute.xlu0 0
        %601 = vperm.xlu0 %600, %v591
        %v602 = vpop.permute.xlu0 %601
        %605 = vset.pattern.permute.xlu0 0
        %606 = vperm.xlu0 %605, %v592
        %v607 = vpop.permute.xlu0 %606
        %610 = vset.pattern.permute.xlu0 0
        %611 = vperm.xlu0 %610, %v593
        %v612 = vpop.permute.xlu0 %611
        %615 = vset.pattern.permute.xlu0 0
        %616 = vperm.xlu0 %615, %v594
        %v617 = vpop.permute.xlu0 %616
        %620 = vset.pattern.permute.xlu0 0
        %621 = vperm.xlu0 %620, %v595
        %v622 = vpop.permute.xlu0 %621
        %625 = vset.pattern.permute.xlu0 0
        %626 = vperm.xlu0 %625, %v596
        %v627 = vpop.permute.xlu0 %626
        %630 = vset.pattern.permute.xlu0 0
        %631 = vperm.xlu0 %630, %v597
        %v632 = vpop.permute.xlu0 %631
        %635 = vset.pattern.permute.xlu0 0
        %636 = vperm.xlu0 %635, %v598
        %v637 = vpop.permute.xlu0 %636
        %v647 = vunpack.c.l.b16 %v583
        %v648 = vunpack.c.l.b16 %v584
        %v649 = vunpack.c.l.b16 %v585
        %v650 = vunpack.c.l.b16 %v586
        %v651 = vunpack.c.l.b16 %v587
        %v652 = vunpack.c.l.b16 %v588
        %v653 = vunpack.c.l.b16 %v589
        %v654 = vunpack.c.l.b16 %v590
        %v655 = vpack.c.b16 %v648, %v647
        %v656 = vpack.c.b16 %v650, %v649
        %v657 = vpack.c.b16 %v652, %v651
        %v658 = vpack.c.b16 %v654, %v653
        %vm659 = vcmask 523264
        %v661 = vsel %vm659, %v655, 0
        %v664 = vsel %vm659, %v656, 0
        %v667 = vsel %vm659, %v657, 0
        %v670 = vsel %vm659, %v658, 0
        %672 = vmatprep.subr.bf16.mxu0 0
        %673 = vmatpush1.bf16.msra.mxu0 %v579
        %674 = vmatprep.subr.bf16.mxu0 0
        %675 = vmatpush1.bf16.msra.mxu0 %v580
        %676 = vmatprep.subr.bf16.mxu0 0
        %677 = vmatpush1.bf16.msra.mxu0 %v581
        %678 = vmatprep.subr.bf16.mxu0 0
        %679 = vmatpush1.bf16.msra.mxu0 %v582
        %680 = vmatprep.subr.bf16.mxu0 0
        %681 = vmatpush1.bf16.msra.mxu0 0
        %682 = vmatprep.subr.bf16.mxu0 0
        %683 = vmatpush1.bf16.msra.mxu0 0
        %684 = vmatprep.subr.bf16.mxu0 0
        %685 = vmatpush1.bf16.msra.mxu0 0
        %686 = vmatprep.subr.bf16.mxu0 0
        %687 = vmatpush1.bf16.msra.mxu0 0
        %688 = vmatprep.subr.bf16.mxu0 0
        %689 = vmatpush1.bf16.msra.mxu0 0
        %690 = vmatprep.subr.bf16.mxu0 0
        %691 = vmatpush1.bf16.msra.mxu0 0
        %692 = vmatprep.subr.bf16.mxu0 0
        %693 = vmatpush1.bf16.msra.mxu0 0
        %694 = vmatprep.subr.bf16.mxu0 0
        %695 = vmatpush1.bf16.msra.mxu0 0
        %696 = vmatprep.subr.bf16.mxu0 0
        %697 = vmatpush1.bf16.msra.mxu0 0
        %698 = vmatprep.subr.bf16.mxu0 0
        %699 = vmatpush1.bf16.msra.mxu0 0
        %700 = vmatprep.subr.bf16.mxu0 0
        %701 = vmatpush1.bf16.msra.mxu0 0
        %702 = vmatprep.subr.bf16.mxu0 0
        %703 = vmatpush1.bf16.msra.mxu0 0
        %704 = vmatprep.mubr.bf16.mxu0 0
        %705 = vmatmul.mubr.bf16.gmra.mrb[0].mxu0 %v661
        %v706 = vpop.f32.mrb[0].mxu0
        %v707 = vadd.f32 %v602, %v706
        %v708 = vpop.f32.mrb[0].mxu0
        %v709 = vpop.f32.mrb[0].mxu0
        %v710 = vadd.f32 %v607, %v709
        %v711 = vpop.f32.mrb[0].mxu0
        %712 = vmatprep.mubr.bf16.mxu0 0
        %713 = vmatmul.mubr.bf16.gmra.mrb[0].mxu0 %v664
        %v714 = vpop.f32.mrb[0].mxu0
        %v715 = vadd.f32 %v612, %v714
        %v716 = vpop.f32.mrb[0].mxu0
        %v717 = vpop.f32.mrb[0].mxu0
        %v718 = vadd.f32 %v617, %v717
        %v719 = vpop.f32.mrb[0].mxu0
        %720 = vmatprep.mubr.bf16.mxu0 0
        %721 = vmatmul.mubr.bf16.gmra.mrb[0].mxu0 %v667
        %v722 = vpop.f32.mrb[0].mxu0
        %v723 = vadd.f32 %v622, %v722
        %v724 = vpop.f32.mrb[0].mxu0
        %v725 = vpop.f32.mrb[0].mxu0
        %v726 = vadd.f32 %v627, %v725
        %v727 = vpop.f32.mrb[0].mxu0
        %728 = vmatprep.mubr.bf16.mxu0 0
        %729 = vmatmul.mubr.bf16.gmra.mrb[0].mxu0 %v670
        %v730 = vpop.f32.mrb[0].mxu0
        %v731 = vadd.f32 %v632, %v730
        %v732 = vpop.f32.mrb[0].mxu0
        %v733 = vpop.f32.mrb[0].mxu0
        %v734 = vadd.f32 %v637, %v733
        %v735 = vpop.f32.mrb[0].mxu0
        %736 = vdwg.mxu0
        %v737 = vmax.f32 %v707, 0.0
        %v738 = vmax.f32 %v710, 0.0
        %v739 = vmax.f32 %v715, 0.0
        %v740 = vmax.f32 %v718, 0.0
        %v741 = vmax.f32 %v723, 0.0
        %v742 = vmax.f32 %v726, 0.0
        %v743 = vmax.f32 %v731, 0.0
        %v744 = vmax.f32 %v734, 0.0
        %v745 = vpack.c.bf16 %v738, %v737
        %v746 = vpack.c.bf16 %v740, %v739
        %v747 = vpack.c.bf16 %v742, %v741
        %v748 = vpack.c.bf16 %v744, %v743
        %v749 = vld [vmem:[%s5] sm:$0xf]
        %v750 = vld [vmem:[%s5 + $0x4] sm:$0xf]
        %v751 = vld [vmem:[%s5 + $0x8] sm:$0xf]
        %v752 = vld [vmem:[%s5 + $0xc] sm:$0xf]
        %v753 = vld [vmem:[%s5 + $0x10] sm:$0xf]
        %v754 = vld [vmem:[%s5 + $0x14] sm:$0xf]
        %v755 = vld [vmem:[%s5 + $0x18] sm:$0xf]
        %v756 = vld [vmem:[%s5 + $0x1c] sm:$0xf]
        %v757 = vld [vmem:[%s6] sm:$0xff]
        %v758 = vld [vmem:[%s6 + $0x8] sm:$0xff]
        %v759 = vld [vmem:[%s6 + $0x10] sm:$0xff]
        %v760 = vld [vmem:[%s6 + $0x18] sm:$0xff]
        %v761 = vld [vmem:[%s6 + $0x20] sm:$0xff]
        %v762 = vld [vmem:[%s6 + $0x28] sm:$0xff]
        %v763 = vld [vmem:[%s6 + $0x30] sm:$0xff]
        %v764 = vld [vmem:[%s6 + $0x38] sm:$0xff]
        %766 = vset.pattern.permute.xlu0 0
        %767 = vperm.xlu0 %766, %v757
        %v768 = vpop.permute.xlu0 %767
        %771 = vset.pattern.permute.xlu0 0
        %772 = vperm.xlu0 %771, %v758
        %v773 = vpop.permute.xlu0 %772
        %776 = vset.pattern.permute.xlu0 0
        %777 = vperm.xlu0 %776, %v759
        %v778 = vpop.permute.xlu0 %777
        %781 = vset.pattern.permute.xlu0 0
        %782 = vperm.xlu0 %781, %v760
        %v783 = vpop.permute.xlu0 %782
        %786 = vset.pattern.permute.xlu0 0
        %787 = vperm.xlu0 %786, %v761
        %v788 = vpop.permute.xlu0 %787
        %791 = vset.pattern.permute.xlu0 0
        %792 = vperm.xlu0 %791, %v762
        %v793 = vpop.permute.xlu0 %792
        %796 = vset.pattern.permute.xlu0 0
        %797 = vperm.xlu0 %796, %v763
        %v798 = vpop.permute.xlu0 %797
        %801 = vset.pattern.permute.xlu0 0
        %802 = vperm.xlu0 %801, %v764
        %v803 = vpop.permute.xlu0 %802
        %v813 = vunpack.c.l.b16 %v749
        %v814 = vunpack.c.l.b16 %v750
        %v815 = vunpack.c.l.b16 %v751
        %v816 = vunpack.c.l.b16 %v752
        %v817 = vunpack.c.l.b16 %v753
        %v818 = vunpack.c.l.b16 %v754
        %v819 = vunpack.c.l.b16 %v755
        %v820 = vunpack.c.l.b16 %v756
        %v821 = vpack.c.b16 %v814, %v813
        %v822 = vpack.c.b16 %v816, %v815
        %v823 = vpack.c.b16 %v818, %v817
        %v824 = vpack.c.b16 %v820, %v819
        %v826 = vsel %vm659, %v821, 0
        %v829 = vsel %vm659, %v822, 0
        %v832 = vsel %vm659, %v823, 0
        %v835 = vsel %vm659, %v824, 0
        %837 = vmatprep.subr.bf16.mxu0 0
        %838 = vmatpush1.bf16.msra.mxu0 %v745
        %839 = vmatprep.subr.bf16.mxu0 0
        %840 = vmatpush1.bf16.msra.mxu0 %v746
        %841 = vmatprep.subr.bf16.mxu0 0
        %842 = vmatpush1.bf16.msra.mxu0 %v747
        %843 = vmatprep.subr.bf16.mxu0 0
        %844 = vmatpush1.bf16.msra.mxu0 %v748
        %845 = vmatprep.subr.bf16.mxu0 0
        %846 = vmatpush1.bf16.msra.mxu0 0
        %847 = vmatprep.subr.bf16.mxu0 0
        %848 = vmatpush1.bf16.msra.mxu0 0
        %849 = vmatprep.subr.bf16.mxu0 0
        %850 = vmatpush1.bf16.msra.mxu0 0
        %851 = vmatprep.subr.bf16.mxu0 0
        %852 = vmatpush1.bf16.msra.mxu0 0
        %853 = vmatprep.subr.bf16.mxu0 0
        %854 = vmatpush1.bf16.msra.mxu0 0
        %855 = vmatprep.subr.bf16.mxu0 0
        %856 = vmatpush1.bf16.msra.mxu0 0
        %857 = vmatprep.subr.bf16.mxu0 0
        %858 = vmatpush1.bf16.msra.mxu0 0
        %859 = vmatprep.subr.bf16.mxu0 0
        %860 = vmatpush1.bf16.msra.mxu0 0
        %861 = vmatprep.subr.bf16.mxu0 0
        %862 = vmatpush1.bf16.msra.mxu0 0
        %863 = vmatprep.subr.bf16.mxu0 0
        %864 = vmatpush1.bf16.msra.mxu0 0
        %865 = vmatprep.subr.bf16.mxu0 0
        %866 = vmatpush1.bf16.msra.mxu0 0
        %867 = vmatprep.subr.bf16.mxu0 0
        %868 = vmatpush1.bf16.msra.mxu0 0
        %869 = vmatprep.mubr.bf16.mxu0 0
        %870 = vmatmul.mubr.bf16.gmra.mrb[0].mxu0 %v826
        %v871 = vpop.f32.mrb[0].mxu0
        %v872 = vadd.f32 %v768, %v871
        %v873 = vpop.f32.mrb[0].mxu0
        %v874 = vpop.f32.mrb[0].mxu0
        %v875 = vadd.f32 %v773, %v874
        %v876 = vpop.f32.mrb[0].mxu0
        %877 = vmatprep.mubr.bf16.mxu0 0
        %878 = vmatmul.mubr.bf16.gmra.mrb[0].mxu0 %v829
        %v879 = vpop.f32.mrb[0].mxu0
        %v880 = vadd.f32 %v778, %v879
        %v881 = vpop.f32.mrb[0].mxu0
        %v882 = vpop.f32.mrb[0].mxu0
        %v883 = vadd.f32 %v783, %v882
        %v884 = vpop.f32.mrb[0].mxu0
        %885 = vmatprep.mubr.bf16.mxu0 0
        %886 = vmatmul.mubr.bf16.gmra.mrb[0].mxu0 %v832
        %v887 = vpop.f32.mrb[0].mxu0
        %v888 = vadd.f32 %v788, %v887
        %v889 = vpop.f32.mrb[0].mxu0
        %v890 = vpop.f32.mrb[0].mxu0
        %v891 = vadd.f32 %v793, %v890
        %v892 = vpop.f32.mrb[0].mxu0
        %893 = vmatprep.mubr.bf16.mxu0 0
        %894 = vmatmul.mubr.bf16.gmra.mrb[0].mxu0 %v835
        %v895 = vpop.f32.mrb[0].mxu0
        %v896 = vadd.f32 %v798, %v895
        %v897 = vpop.f32.mrb[0].mxu0
        %v898 = vpop.f32.mrb[0].mxu0
        %v899 = vadd.f32 %v803, %v898
        %v900 = vpop.f32.mrb[0].mxu0
        %901 = vdwg.mxu0
        %v902 = vmax.f32 %v872, 0.0
        %v903 = vmax.f32 %v875, 0.0
        %v904 = vmax.f32 %v880, 0.0
        %v905 = vmax.f32 %v883, 0.0
        %v906 = vmax.f32 %v888, 0.0
        %v907 = vmax.f32 %v891, 0.0
        %v908 = vmax.f32 %v896, 0.0
        %v909 = vmax.f32 %v899, 0.0
        %v910 = vpack.c.bf16 %v903, %v902
        %v911 = vpack.c.bf16 %v905, %v904
        %v912 = vpack.c.bf16 %v907, %v906
        %v913 = vpack.c.bf16 %v909, %v908
        %v914 = vld [vmem:[%s7] sm:$0xf]
        %v915 = vld [vmem:[%s7 + $0x4] sm:$0xf]
        %v916 = vld [vmem:[%s7 + $0x8] sm:$0xf]
        %v917 = vld [vmem:[%s7 + $0xc] sm:$0xf]
        %v918 = vld [vmem:[%s7 + $0x10] sm:$0xf]
        %v919 = vld [vmem:[%s7 + $0x14] sm:$0xf]
        %v920 = vld [vmem:[%s7 + $0x18] sm:$0xf]
        %v921 = vld [vmem:[%s7 + $0x1c] sm:$0xf]
        %v922 = vld [vmem:[%s7 + $0x20] sm:$0xf]
        %v923 = vld [vmem:[%s7 + $0x24] sm:$0xf]
        %v924 = vld [vmem:[%s7 + $0x28] sm:$0xf]
        %v925 = vld [vmem:[%s7 + $0x2c] sm:$0xf]
        %v926 = vld [vmem:[%s7 + $0x30] sm:$0xf]
        %v927 = vld [vmem:[%s7 + $0x34] sm:$0xf]
        %v928 = vld [vmem:[%s7 + $0x38] sm:$0xf]
        %v929 = vld [vmem:[%s7 + $0x3c] sm:$0xf]
        %v930 = vld [vmem:[%s8] sm:$0xff]
        %v931 = vld [vmem:[%s8 + $0x8] sm:$0xff]
        %v932 = vld [vmem:[%s8 + $0x10] sm:$0xff]
        %v933 = vld [vmem:[%s8 + $0x18] sm:$0xff]
        %v934 = vld [vmem:[%s8 + $0x20] sm:$0xff]
        %v935 = vld [vmem:[%s8 + $0x28] sm:$0xff]
        %v936 = vld [vmem:[%s8 + $0x30] sm:$0xff]
        %v937 = vld [vmem:[%s8 + $0x38] sm:$0xff]
        %v938 = vld [vmem:[%s8 + $0x40] sm:$0xff]
        %v939 = vld [vmem:[%s8 + $0x48] sm:$0xff]
        %v940 = vld [vmem:[%s8 + $0x50] sm:$0xff]
        %v941 = vld [vmem:[%s8 + $0x58] sm:$0xff]
        %v942 = vld [vmem:[%s8 + $0x60] sm:$0xff]
        %v943 = vld [vmem:[%s8 + $0x68] sm:$0xff]
        %v944 = vld [vmem:[%s8 + $0x70] sm:$0xff]
        %v945 = vld [vmem:[%s8 + $0x78] sm:$0xff]
        %947 = vset.pattern.permute.xlu0 0
        %948 = vperm.xlu0 %947, %v930
        %v949 = vpop.permute.xlu0 %948
        %952 = vset.pattern.permute.xlu0 0
        %953 = vperm.xlu0 %952, %v931
        %v954 = vpop.permute.xlu0 %953
        %957 = vset.pattern.permute.xlu0 0
        %958 = vperm.xlu0 %957, %v932
        %v959 = vpop.permute.xlu0 %958
        %962 = vset.pattern.permute.xlu0 0
        %963 = vperm.xlu0 %962, %v933
        %v964 = vpop.permute.xlu0 %963
        %967 = vset.pattern.permute.xlu0 0
        %968 = vperm.xlu0 %967, %v934
        %v969 = vpop.permute.xlu0 %968
        %972 = vset.pattern.permute.xlu0 0
        %973 = vperm.xlu0 %972, %v935
        %v974 = vpop.permute.xlu0 %973
        %977 = vset.pattern.permute.xlu0 0
        %978 = vperm.xlu0 %977, %v936
        %v979 = vpop.permute.xlu0 %978
        %982 = vset.pattern.permute.xlu0 0
        %983 = vperm.xlu0 %982, %v937
        %v984 = vpop.permute.xlu0 %983
        %987 = vset.pattern.permute.xlu0 0
        %988 = vperm.xlu0 %987, %v938
        %v989 = vpop.permute.xlu0 %988
        %992 = vset.pattern.permute.xlu0 0
        %993 = vperm.xlu0 %992, %v939
        %v994 = vpop.permute.xlu0 %993
        %997 = vset.pattern.permute.xlu0 0
        %998 = vperm.xlu0 %997, %v940
        %v999 = vpop.permute.xlu0 %998
        %1002 = vset.pattern.permute.xlu0 0
        %1003 = vperm.xlu0 %1002, %v941
        %v1004 = vpop.permute.xlu0 %1003
        %1007 = vset.pattern.permute.xlu0 0
        %1008 = vperm.xlu0 %1007, %v942
        %v1009 = vpop.permute.xlu0 %1008
        %1012 = vset.pattern.permute.xlu0 0
        %1013 = vperm.xlu0 %1012, %v943
        %v1014 = vpop.permute.xlu0 %1013
        %1017 = vset.pattern.permute.xlu0 0
        %1018 = vperm.xlu0 %1017, %v944
        %v1019 = vpop.permute.xlu0 %1018
        %1022 = vset.pattern.permute.xlu0 0
        %1023 = vperm.xlu0 %1022, %v945
        %v1024 = vpop.permute.xlu0 %1023
        %v1042 = vunpack.c.l.b16 %v914
        %v1043 = vunpack.c.l.b16 %v915
        %v1044 = vunpack.c.l.b16 %v916
        %v1045 = vunpack.c.l.b16 %v917
        %v1046 = vunpack.c.l.b16 %v918
        %v1047 = vunpack.c.l.b16 %v919
        %v1048 = vunpack.c.l.b16 %v920
        %v1049 = vunpack.c.l.b16 %v921
        %v1050 = vunpack.c.l.b16 %v922
        %v1051 = vunpack.c.l.b16 %v923
        %v1052 = vunpack.c.l.b16 %v924
        %v1053 = vunpack.c.l.b16 %v925
        %v1054 = vunpack.c.l.b16 %v926
        %v1055 = vunpack.c.l.b16 %v927
        %v1056 = vunpack.c.l.b16 %v928
        %v1057 = vunpack.c.l.b16 %v929
        %v1058 = vpack.c.b16 %v1043, %v1042
        %v1059 = vpack.c.b16 %v1045, %v1044
        %v1060 = vpack.c.b16 %v1047, %v1046
        %v1061 = vpack.c.b16 %v1049, %v1048
        %v1062 = vpack.c.b16 %v1051, %v1050
        %v1063 = vpack.c.b16 %v1053, %v1052
        %v1064 = vpack.c.b16 %v1055, %v1054
        %v1065 = vpack.c.b16 %v1057, %v1056
        %v1067 = vsel %vm659, %v1058, 0
        %v1070 = vsel %vm659, %v1059, 0
        %v1073 = vsel %vm659, %v1060, 0
        %v1076 = vsel %vm659, %v1061, 0
        %v1079 = vsel %vm659, %v1062, 0
        %v1082 = vsel %vm659, %v1063, 0
        %v1085 = vsel %vm659, %v1064, 0
        %v1088 = vsel %vm659, %v1065, 0
        %1090 = vmatprep.subr.bf16.mxu0 0
        %1091 = vmatpush1.bf16.msra.mxu0 %v910
        %1092 = vmatprep.subr.bf16.mxu0 0
        %1093 = vmatpush1.bf16.msra.mxu0 %v911
        %1094 = vmatprep.subr.bf16.mxu0 0
        %1095 = vmatpush1.bf16.msra.mxu0 %v912
        %1096 = vmatprep.subr.bf16.mxu0 0
        %1097 = vmatpush1.bf16.msra.mxu0 %v913
        %1098 = vmatprep.subr.bf16.mxu0 0
        %1099 = vmatpush1.bf16.msra.mxu0 0
        %1100 = vmatprep.subr.bf16.mxu0 0
        %1101 = vmatpush1.bf16.msra.mxu0 0
        %1102 = vmatprep.subr.bf16.mxu0 0
        %1103 = vmatpush1.bf16.msra.mxu0 0
        %1104 = vmatprep.subr.bf16.mxu0 0
        %1105 = vmatpush1.bf16.msra.mxu0 0
        %1106 = vmatprep.subr.bf16.mxu0 0
        %1107 = vmatpush1.bf16.msra.mxu0 0
        %1108 = vmatprep.subr.bf16.mxu0 0
        %1109 = vmatpush1.bf16.msra.mxu0 0
        %1110 = vmatprep.subr.bf16.mxu0 0
        %1111 = vmatpush1.bf16.msra.mxu0 0
        %1112 = vmatprep.subr.bf16.mxu0 0
        %1113 = vmatpush1.bf16.msra.mxu0 0
        %1114 = vmatprep.subr.bf16.mxu0 0
        %1115 = vmatpush1.bf16.msra.mxu0 0
        %1116 = vmatprep.subr.bf16.mxu0 0
        %1117 = vmatpush1.bf16.msra.mxu0 0
        %1118 = vmatprep.subr.bf16.mxu0 0
        %1119 = vmatpush1.bf16.msra.mxu0 0
        %1120 = vmatprep.subr.bf16.mxu0 0
        %1121 = vmatpush1.bf16.msra.mxu0 0
        %1122 = vmatprep.mubr.bf16.mxu0 0
        %1123 = vmatmul.mubr.bf16.gmra.mrb[0].mxu0 %v1067
        %v1124 = vpop.f32.mrb[0].mxu0
        %v1125 = vadd.f32 %v949, %v1124
        %v1126 = vpop.f32.mrb[0].mxu0
        %v1127 = vpop.f32.mrb[0].mxu0
        %v1128 = vadd.f32 %v954, %v1127
        %v1129 = vpop.f32.mrb[0].mxu0
        %1130 = vmatprep.mubr.bf16.mxu0 0
        %1131 = vmatmul.mubr.bf16.gmra.mrb[0].mxu0 %v1070
        %v1132 = vpop.f32.mrb[0].mxu0
        %v1133 = vadd.f32 %v959, %v1132
        %v1134 = vpop.f32.mrb[0].mxu0
        %v1135 = vpop.f32.mrb[0].mxu0
        %v1136 = vadd.f32 %v964, %v1135
        %v1137 = vpop.f32.mrb[0].mxu0
        %1138 = vmatprep.mubr.bf16.mxu0 0
        %1139 = vmatmul.mubr.bf16.gmra.mrb[0].mxu0 %v1073
        %v1140 = vpop.f32.mrb[0].mxu0
        %v1141 = vadd.f32 %v969, %v1140
        %v1142 = vpop.f32.mrb[0].mxu0
        %v1143 = vpop.f32.mrb[0].mxu0
        %v1144 = vadd.f32 %v974, %v1143
        %v1145 = vpop.f32.mrb[0].mxu0
        %1146 = vmatprep.mubr.bf16.mxu0 0
        %1147 = vmatmul.mubr.bf16.gmra.mrb[0].mxu0 %v1076
        %v1148 = vpop.f32.mrb[0].mxu0
        %v1149 = vadd.f32 %v979, %v1148
        %v1150 = vpop.f32.mrb[0].mxu0
        %v1151 = vpop.f32.mrb[0].mxu0
        %v1152 = vadd.f32 %v984, %v1151
        %v1153 = vpop.f32.mrb[0].mxu0
        %1154 = vmatprep.mubr.bf16.mxu0 0
        %1155 = vmatmul.mubr.bf16.gmra.mrb[0].mxu0 %v1079
        %v1156 = vpop.f32.mrb[0].mxu0
        %v1157 = vadd.f32 %v989, %v1156
        %v1158 = vpop.f32.mrb[0].mxu0
        %v1159 = vpop.f32.mrb[0].mxu0
        %v1160 = vadd.f32 %v994, %v1159
        %v1161 = vpop.f32.mrb[0].mxu0
        %1162 = vmatprep.mubr.bf16.mxu0 0
        %1163 = vmatmul.mubr.bf16.gmra.mrb[0].mxu0 %v1082
        %v1164 = vpop.f32.mrb[0].mxu0
        %v1165 = vadd.f32 %v999, %v1164
        %v1166 = vpop.f32.mrb[0].mxu0
        %v1167 = vpop.f32.mrb[0].mxu0
        %v1168 = vadd.f32 %v1004, %v1167
        %v1169 = vpop.f32.mrb[0].mxu0
        %1170 = vmatprep.mubr.bf16.mxu0 0
        %1171 = vmatmul.mubr.bf16.gmra.mrb[0].mxu0 %v1085
        %v1172 = vpop.f32.mrb[0].mxu0
        %v1173 = vadd.f32 %v1009, %v1172
        %v1174 = vpop.f32.mrb[0].mxu0
        %v1175 = vpop.f32.mrb[0].mxu0
        %v1176 = vadd.f32 %v1014, %v1175
        %v1177 = vpop.f32.mrb[0].mxu0
        %1178 = vmatprep.mubr.bf16.mxu0 0
        %1179 = vmatmul.mubr.bf16.gmra.mrb[0].mxu0 %v1088
        %v1180 = vpop.f32.mrb[0].mxu0
        %v1181 = vadd.f32 %v1019, %v1180
        %v1182 = vpop.f32.mrb[0].mxu0
        %v1183 = vpop.f32.mrb[0].mxu0
        %v1184 = vadd.f32 %v1024, %v1183
        %v1185 = vpop.f32.mrb[0].mxu0
        %1186 = vdwg.mxu0
        %v1187 = vmax.f32 %v1125, 0.0
        %v1188 = vmax.f32 %v1128, 0.0
        %v1189 = vmax.f32 %v1133, 0.0
        %v1190 = vmax.f32 %v1136, 0.0
        %v1191 = vmax.f32 %v1141, 0.0
        %v1192 = vmax.f32 %v1144, 0.0
        %v1193 = vmax.f32 %v1149, 0.0
        %v1194 = vmax.f32 %v1152, 0.0
        %v1195 = vmax.f32 %v1157, 0.0
        %v1196 = vmax.f32 %v1160, 0.0
        %v1197 = vmax.f32 %v1165, 0.0
        %v1198 = vmax.f32 %v1168, 0.0
        %v1199 = vmax.f32 %v1173, 0.0
        %v1200 = vmax.f32 %v1176, 0.0
        %v1201 = vmax.f32 %v1181, 0.0
        %v1202 = vmax.f32 %v1184, 0.0
        %v1203 = vpack.c.bf16 %v1188, %v1187
        %v1204 = vpack.c.bf16 %v1190, %v1189
        %v1205 = vpack.c.bf16 %v1192, %v1191
        %v1206 = vpack.c.bf16 %v1194, %v1193
        %v1207 = vpack.c.bf16 %v1196, %v1195
        %v1208 = vpack.c.bf16 %v1198, %v1197
        %v1209 = vpack.c.bf16 %v1200, %v1199
        %v1210 = vpack.c.bf16 %v1202, %v1201
        %v1211 = vld [vmem:[%s9] sm:$0xf]
        %v1212 = vld [vmem:[%s9 + $0x4] sm:$0xf]
        %v1213 = vld [vmem:[%s9 + $0x8] sm:$0xf]
        %v1214 = vld [vmem:[%s9 + $0xc] sm:$0xf]
        %v1215 = vld [vmem:[%s9 + $0x10] sm:$0xf]
        %v1216 = vld [vmem:[%s9 + $0x14] sm:$0xf]
        %v1217 = vld [vmem:[%s9 + $0x18] sm:$0xf]
        %v1218 = vld [vmem:[%s9 + $0x1c] sm:$0xf]
        %v1219 = vld [vmem:[%s9 + $0x20] sm:$0xf]
        %v1220 = vld [vmem:[%s9 + $0x24] sm:$0xf]
        %v1221 = vld [vmem:[%s9 + $0x28] sm:$0xf]
        %v1222 = vld [vmem:[%s9 + $0x2c] sm:$0xf]
        %v1223 = vld [vmem:[%s9 + $0x30] sm:$0xf]
        %v1224 = vld [vmem:[%s9 + $0x34] sm:$0xf]
        %v1225 = vld [vmem:[%s9 + $0x38] sm:$0xf]
        %v1226 = vld [vmem:[%s9 + $0x3c] sm:$0xf]
        %v1227 = vld [vmem:[%s9 + $0x40] sm:$0xf]
        %v1228 = vld [vmem:[%s9 + $0x44] sm:$0xf]
        %v1229 = vld [vmem:[%s9 + $0x48] sm:$0xf]
        %v1230 = vld [vmem:[%s9 + $0x4c] sm:$0xf]
        %v1231 = vld [vmem:[%s9 + $0x50] sm:$0xf]
        %v1232 = vld [vmem:[%s9 + $0x54] sm:$0xf]
        %v1233 = vld [vmem:[%s9 + $0x58] sm:$0xf]
        %v1234 = vld [vmem:[%s9 + $0x5c] sm:$0xf]
        %v1235 = vld [vmem:[%s9 + $0x60] sm:$0xf]
        %v1236 = vld [vmem:[%s9 + $0x64] sm:$0xf]
        %v1237 = vld [vmem:[%s9 + $0x68] sm:$0xf]
        %v1238 = vld [vmem:[%s9 + $0x6c] sm:$0xf]
        %v1239 = vld [vmem:[%s9 + $0x70] sm:$0xf]
        %v1240 = vld [vmem:[%s9 + $0x74] sm:$0xf]
        %v1241 = vld [vmem:[%s9 + $0x78] sm:$0xf]
        %v1242 = vld [vmem:[%s9 + $0x7c] sm:$0xf]
        %v1243 = vld [vmem:[%s9 + $0x80] sm:$0xf]
        %v1244 = vld [vmem:[%s9 + $0x84] sm:$0xf]
        %v1245 = vld [vmem:[%s9 + $0x88] sm:$0xf]
        %v1246 = vld [vmem:[%s9 + $0x8c] sm:$0xf]
        %v1247 = vld [vmem:[%s9 + $0x90] sm:$0xf]
        %v1248 = vld [vmem:[%s9 + $0x94] sm:$0xf]
        %v1249 = vld [vmem:[%s9 + $0x98] sm:$0xf]
        %v1250 = vld [vmem:[%s9 + $0x9c] sm:$0xf]
        %v1251 = vld [vmem:[%s9 + $0xa0] sm:$0xf]
        %v1252 = vld [vmem:[%s9 + $0xa4] sm:$0xf]
        %v1253 = vld [vmem:[%s9 + $0xa8] sm:$0xf]
        %v1254 = vld [vmem:[%s9 + $0xac] sm:$0xf]
        %v1255 = vld [vmem:[%s9 + $0xb0] sm:$0xf]
        %v1256 = vld [vmem:[%s9 + $0xb4] sm:$0xf]
        %v1257 = vld [vmem:[%s9 + $0xb8] sm:$0xf]
        %v1258 = vld [vmem:[%s9 + $0xbc] sm:$0xf]
        %v1259 = vld [vmem:[%s9 + $0xc0] sm:$0xf]
        %v1260 = vld [vmem:[%s9 + $0xc4] sm:$0xf]
        %v1261 = vld [vmem:[%s9 + $0xc8] sm:$0xf]
        %v1262 = vld [vmem:[%s9 + $0xcc] sm:$0xf]
        %v1263 = vld [vmem:[%s9 + $0xd0] sm:$0xf]
        %v1264 = vld [vmem:[%s9 + $0xd4] sm:$0xf]
        %v1265 = vld [vmem:[%s9 + $0xd8] sm:$0xf]
        %v1266 = vld [vmem:[%s9 + $0xdc] sm:$0xf]
        %v1267 = vld [vmem:[%s9 + $0xe0] sm:$0xf]
        %v1268 = vld [vmem:[%s9 + $0xe4] sm:$0xf]
        %v1269 = vld [vmem:[%s9 + $0xe8] sm:$0xf]
        %v1270 = vld [vmem:[%s9 + $0xec] sm:$0xf]
        %v1271 = vld [vmem:[%s9 + $0xf0] sm:$0xf]
        %v1272 = vld [vmem:[%s9 + $0xf4] sm:$0xf]
        %v1273 = vld [vmem:[%s9 + $0xf8] sm:$0xf]
        %v1274 = vld [vmem:[%s9 + $0xfc] sm:$0xf]
        %v1275 = vld [vmem:[%s10] sm:$0xff]
        %v1276 = vld [vmem:[%s10 + $0x8] sm:$0xff]
        %v1277 = vld [vmem:[%s10 + $0x10] sm:$0xff]
        %v1278 = vld [vmem:[%s10 + $0x18] sm:$0xff]
        %v1279 = vld [vmem:[%s10 + $0x20] sm:$0xff]
        %v1280 = vld [vmem:[%s10 + $0x28] sm:$0xff]
        %v1281 = vld [vmem:[%s10 + $0x30] sm:$0xff]
        %v1282 = vld [vmem:[%s10 + $0x38] sm:$0xff]
        %v1283 = vld [vmem:[%s10 + $0x40] sm:$0xff]
        %v1284 = vld [vmem:[%s10 + $0x48] sm:$0xff]
        %v1285 = vld [vmem:[%s10 + $0x50] sm:$0xff]
        %v1286 = vld [vmem:[%s10 + $0x58] sm:$0xff]
        %v1287 = vld [vmem:[%s10 + $0x60] sm:$0xff]
        %v1288 = vld [vmem:[%s10 + $0x68] sm:$0xff]
        %v1289 = vld [vmem:[%s10 + $0x70] sm:$0xff]
        %v1290 = vld [vmem:[%s10 + $0x78] sm:$0xff]
        %v1291 = vld [vmem:[%s10 + $0x80] sm:$0xff]
        %v1292 = vld [vmem:[%s10 + $0x88] sm:$0xff]
        %v1293 = vld [vmem:[%s10 + $0x90] sm:$0xff]
        %v1294 = vld [vmem:[%s10 + $0x98] sm:$0xff]
        %v1295 = vld [vmem:[%s10 + $0xa0] sm:$0xff]
        %v1296 = vld [vmem:[%s10 + $0xa8] sm:$0xff]
        %v1297 = vld [vmem:[%s10 + $0xb0] sm:$0xff]
        %v1298 = vld [vmem:[%s10 + $0xb8] sm:$0xff]
        %v1299 = vld [vmem:[%s10 + $0xc0] sm:$0xff]
        %v1300 = vld [vmem:[%s10 + $0xc8] sm:$0xff]
        %v1301 = vld [vmem:[%s10 + $0xd0] sm:$0xff]
        %v1302 = vld [vmem:[%s10 + $0xd8] sm:$0xff]
        %v1303 = vld [vmem:[%s10 + $0xe0] sm:$0xff]
        %v1304 = vld [vmem:[%s10 + $0xe8] sm:$0xff]
        %v1305 = vld [vmem:[%s10 + $0xf0] sm:$0xff]
        %v1306 = vld [vmem:[%s10 + $0xf8] sm:$0xff]
        %v1307 = vld [vmem:[%s10 + $0x100] sm:$0xff]
        %v1308 = vld [vmem:[%s10 + $0x108] sm:$0xff]
        %v1309 = vld [vmem:[%s10 + $0x110] sm:$0xff]
        %v1310 = vld [vmem:[%s10 + $0x118] sm:$0xff]
        %v1311 = vld [vmem:[%s10 + $0x120] sm:$0xff]
        %v1312 = vld [vmem:[%s10 + $0x128] sm:$0xff]
        %v1313 = vld [vmem:[%s10 + $0x130] sm:$0xff]
        %v1314 = vld [vmem:[%s10 + $0x138] sm:$0xff]
        %v1315 = vld [vmem:[%s10 + $0x140] sm:$0xff]
        %v1316 = vld [vmem:[%s10 + $0x148] sm:$0xff]
        %v1317 = vld [vmem:[%s10 + $0x150] sm:$0xff]
        %v1318 = vld [vmem:[%s10 + $0x158] sm:$0xff]
        %v1319 = vld [vmem:[%s10 + $0x160] sm:$0xff]
        %v1320 = vld [vmem:[%s10 + $0x168] sm:$0xff]
        %v1321 = vld [vmem:[%s10 + $0x170] sm:$0xff]
        %v1322 = vld [vmem:[%s10 + $0x178] sm:$0xff]
        %v1323 = vld [vmem:[%s10 + $0x180] sm:$0xff]
        %v1324 = vld [vmem:[%s10 + $0x188] sm:$0xff]
        %v1325 = vld [vmem:[%s10 + $0x190] sm:$0xff]
        %v1326 = vld [vmem:[%s10 + $0x198] sm:$0xff]
        %v1327 = vld [vmem:[%s10 + $0x1a0] sm:$0xff]
        %v1328 = vld [vmem:[%s10 + $0x1a8] sm:$0xff]
        %v1329 = vld [vmem:[%s10 + $0x1b0] sm:$0xff]
        %v1330 = vld [vmem:[%s10 + $0x1b8] sm:$0xff]
        %v1331 = vld [vmem:[%s10 + $0x1c0] sm:$0xff]
        %v1332 = vld [vmem:[%s10 + $0x1c8] sm:$0xff]
        %v1333 = vld [vmem:[%s10 + $0x1d0] sm:$0xff]
        %v1334 = vld [vmem:[%s10 + $0x1d8] sm:$0xff]
        %v1335 = vld [vmem:[%s10 + $0x1e0] sm:$0xff]
        %v1336 = vld [vmem:[%s10 + $0x1e8] sm:$0xff]
        %v1337 = vld [vmem:[%s10 + $0x1f0] sm:$0xff]
        %v1338 = vld [vmem:[%s10 + $0x1f8] sm:$0xff]
        %1340 = vset.pattern.permute.xlu0 0
        %1341 = vperm.xlu0 %1340, %v1275
        %v1342 = vpop.permute.xlu0 %1341
        %1345 = vset.pattern.permute.xlu0 0
        %1346 = vperm.xlu0 %1345, %v1276
        %v1347 = vpop.permute.xlu0 %1346
        %1350 = vset.pattern.permute.xlu0 0
        %1351 = vperm.xlu0 %1350, %v1277
        %v1352 = vpop.permute.xlu0 %1351
        %1355 = vset.pattern.permute.xlu0 0
        %1356 = vperm.xlu0 %1355, %v1278
        %v1357 = vpop.permute.xlu0 %1356
        %1360 = vset.pattern.permute.xlu0 0
        %1361 = vperm.xlu0 %1360, %v1279
        %v1362 = vpop.permute.xlu0 %1361
        %1365 = vset.pattern.permute.xlu0 0
        %1366 = vperm.xlu0 %1365, %v1280
        %v1367 = vpop.permute.xlu0 %1366
        %1370 = vset.pattern.permute.xlu0 0
        %1371 = vperm.xlu0 %1370, %v1281
        %v1372 = vpop.permute.xlu0 %1371
        %1375 = vset.pattern.permute.xlu0 0
        %1376 = vperm.xlu0 %1375, %v1282
        %v1377 = vpop.permute.xlu0 %1376
        %1380 = vset.pattern.permute.xlu0 0
        %1381 = vperm.xlu0 %1380, %v1283
        %v1382 = vpop.permute.xlu0 %1381
        %1385 = vset.pattern.permute.xlu0 0
        %1386 = vperm.xlu0 %1385, %v1284
        %v1387 = vpop.permute.xlu0 %1386
        %1390 = vset.pattern.permute.xlu0 0
        %1391 = vperm.xlu0 %1390, %v1285
        %v1392 = vpop.permute.xlu0 %1391
        %1395 = vset.pattern.permute.xlu0 0
        %1396 = vperm.xlu0 %1395, %v1286
        %v1397 = vpop.permute.xlu0 %1396
        %1400 = vset.pattern.permute.xlu0 0
        %1401 = vperm.xlu0 %1400, %v1287
        %v1402 = vpop.permute.xlu0 %1401
        %1405 = vset.pattern.permute.xlu0 0
        %1406 = vperm.xlu0 %1405, %v1288
        %v1407 = vpop.permute.xlu0 %1406
        %1410 = vset.pattern.permute.xlu0 0
        %1411 = vperm.xlu0 %1410, %v1289
        %v1412 = vpop.permute.xlu0 %1411
        %1415 = vset.pattern.permute.xlu0 0
        %1416 = vperm.xlu0 %1415, %v1290
        %v1417 = vpop.permute.xlu0 %1416
        %1420 = vset.pattern.permute.xlu0 0
        %1421 = vperm.xlu0 %1420, %v1291
        %v1422 = vpop.permute.xlu0 %1421
        %1425 = vset.pattern.permute.xlu0 0
        %1426 = vperm.xlu0 %1425, %v1292
        %v1427 = vpop.permute.xlu0 %1426
        %1430 = vset.pattern.permute.xlu0 0
        %1431 = vperm.xlu0 %1430, %v1293
        %v1432 = vpop.permute.xlu0 %1431
        %1435 = vset.pattern.permute.xlu0 0
        %1436 = vperm.xlu0 %1435, %v1294
        %v1437 = vpop.permute.xlu0 %1436
        %1440 = vset.pattern.permute.xlu0 0
        %1441 = vperm.xlu0 %1440, %v1295
        %v1442 = vpop.permute.xlu0 %1441
        %1445 = vset.pattern.permute.xlu0 0
        %1446 = vperm.xlu0 %1445, %v1296
        %v1447 = vpop.permute.xlu0 %1446
        %1450 = vset.pattern.permute.xlu0 0
        %1451 = vperm.xlu0 %1450, %v1297
        %v1452 = vpop.permute.xlu0 %1451
        %1455 = vset.pattern.permute.xlu0 0
        %1456 = vperm.xlu0 %1455, %v1298
        %v1457 = vpop.permute.xlu0 %1456
        %1460 = vset.pattern.permute.xlu0 0
        %1461 = vperm.xlu0 %1460, %v1299
        %v1462 = vpop.permute.xlu0 %1461
        %1465 = vset.pattern.permute.xlu0 0
        %1466 = vperm.xlu0 %1465, %v1300
        %v1467 = vpop.permute.xlu0 %1466
        %1470 = vset.pattern.permute.xlu0 0
        %1471 = vperm.xlu0 %1470, %v1301
        %v1472 = vpop.permute.xlu0 %1471
        %1475 = vset.pattern.permute.xlu0 0
        %1476 = vperm.xlu0 %1475, %v1302
        %v1477 = vpop.permute.xlu0 %1476
        %1480 = vset.pattern.permute.xlu0 0
        %1481 = vperm.xlu0 %1480, %v1303
        %v1482 = vpop.permute.xlu0 %1481
        %1485 = vset.pattern.permute.xlu0 0
        %1486 = vperm.xlu0 %1485, %v1304
        %v1487 = vpop.permute.xlu0 %1486
        %1490 = vset.pattern.permute.xlu0 0
        %1491 = vperm.xlu0 %1490, %v1305
        %v1492 = vpop.permute.xlu0 %1491
        %1495 = vset.pattern.permute.xlu0 0
        %1496 = vperm.xlu0 %1495, %v1306
        %v1497 = vpop.permute.xlu0 %1496
        %1500 = vset.pattern.permute.xlu0 0
        %1501 = vperm.xlu0 %1500, %v1307
        %v1502 = vpop.permute.xlu0 %1501
        %1505 = vset.pattern.permute.xlu0 0
        %1506 = vperm.xlu0 %1505, %v1308
        %v1507 = vpop.permute.xlu0 %1506
        %1510 = vset.pattern.permute.xlu0 0
        %1511 = vperm.xlu0 %1510, %v1309
        %v1512 = vpop.permute.xlu0 %1511
        %1515 = vset.pattern.permute.xlu0 0
        %1516 = vperm.xlu0 %1515, %v1310
        %v1517 = vpop.permute.xlu0 %1516
        %1520 = vset.pattern.permute.xlu0 0
        %1521 = vperm.xlu0 %1520, %v1311
        %v1522 = vpop.permute.xlu0 %1521
        %1525 = vset.pattern.permute.xlu0 0
        %1526 = vperm.xlu0 %1525, %v1312
        %v1527 = vpop.permute.xlu0 %1526
        %1530 = vset.pattern.permute.xlu0 0
        %1531 = vperm.xlu0 %1530, %v1313
        %v1532 = vpop.permute.xlu0 %1531
        %1535 = vset.pattern.permute.xlu0 0
        %1536 = vperm.xlu0 %1535, %v1314
        %v1537 = vpop.permute.xlu0 %1536
        %1540 = vset.pattern.permute.xlu0 0
        %1541 = vperm.xlu0 %1540, %v1315
        %v1542 = vpop.permute.xlu0 %1541
        %1545 = vset.pattern.permute.xlu0 0
        %1546 = vperm.xlu0 %1545, %v1316
        %v1547 = vpop.permute.xlu0 %1546
        %1550 = vset.pattern.permute.xlu0 0
        %1551 = vperm.xlu0 %1550, %v1317
        %v1552 = vpop.permute.xlu0 %1551
        %1555 = vset.pattern.permute.xlu0 0
        %1556 = vperm.xlu0 %1555, %v1318
        %v1557 = vpop.permute.xlu0 %1556
        %1560 = vset.pattern.permute.xlu0 0
        %1561 = vperm.xlu0 %1560, %v1319
        %v1562 = vpop.permute.xlu0 %1561
        %1565 = vset.pattern.permute.xlu0 0
        %1566 = vperm.xlu0 %1565, %v1320
        %v1567 = vpop.permute.xlu0 %1566
        %1570 = vset.pattern.permute.xlu0 0
        %1571 = vperm.xlu0 %1570, %v1321
        %v1572 = vpop.permute.xlu0 %1571
        %1575 = vset.pattern.permute.xlu0 0
        %1576 = vperm.xlu0 %1575, %v1322
        %v1577 = vpop.permute.xlu0 %1576
        %1580 = vset.pattern.permute.xlu0 0
        %1581 = vperm.xlu0 %1580, %v1323
        %v1582 = vpop.permute.xlu0 %1581
        %1585 = vset.pattern.permute.xlu0 0
        %1586 = vperm.xlu0 %1585, %v1324
        %v1587 = vpop.permute.xlu0 %1586
        %1590 = vset.pattern.permute.xlu0 0
        %1591 = vperm.xlu0 %1590, %v1325
        %v1592 = vpop.permute.xlu0 %1591
        %1595 = vset.pattern.permute.xlu0 0
        %1596 = vperm.xlu0 %1595, %v1326
        %v1597 = vpop.permute.xlu0 %1596
        %1600 = vset.pattern.permute.xlu0 0
        %1601 = vperm.xlu0 %1600, %v1327
        %v1602 = vpop.permute.xlu0 %1601
        %1605 = vset.pattern.permute.xlu0 0
        %1606 = vperm.xlu0 %1605, %v1328
        %v1607 = vpop.permute.xlu0 %1606
        %1610 = vset.pattern.permute.xlu0 0
        %1611 = vperm.xlu0 %1610, %v1329
        %v1612 = vpop.permute.xlu0 %1611
        %1615 = vset.pattern.permute.xlu0 0
        %1616 = vperm.xlu0 %1615, %v1330
        %v1617 = vpop.permute.xlu0 %1616
        %1620 = vset.pattern.permute.xlu0 0
        %1621 = vperm.xlu0 %1620, %v1331
        %v1622 = vpop.permute.xlu0 %1621
        %1625 = vset.pattern.permute.xlu0 0
        %1626 = vperm.xlu0 %1625, %v1332
        %v1627 = vpop.permute.xlu0 %1626
        %1630 = vset.pattern.permute.xlu0 0
        %1631 = vperm.xlu0 %1630, %v1333
        %v1632 = vpop.permute.xlu0 %1631
        %1635 = vset.pattern.permute.xlu0 0
        %1636 = vperm.xlu0 %1635, %v1334
        %v1637 = vpop.permute.xlu0 %1636
        %1640 = vset.pattern.permute.xlu0 0
        %1641 = vperm.xlu0 %1640, %v1335
        %v1642 = vpop.permute.xlu0 %1641
        %1645 = vset.pattern.permute.xlu0 0
        %1646 = vperm.xlu0 %1645, %v1336
        %v1647 = vpop.permute.xlu0 %1646
        %1650 = vset.pattern.permute.xlu0 0
        %1651 = vperm.xlu0 %1650, %v1337
        %v1652 = vpop.permute.xlu0 %1651
        %1655 = vset.pattern.permute.xlu0 0
        %1656 = vperm.xlu0 %1655, %v1338
        %v1657 = vpop.permute.xlu0 %1656
        %v1723 = vunpack.c.l.b16 %v1211
        %v1724 = vunpack.c.l.b16 %v1212
        %v1725 = vunpack.c.l.b16 %v1213
        %v1726 = vunpack.c.l.b16 %v1214
        %v1727 = vunpack.c.l.b16 %v1215
        %v1728 = vunpack.c.l.b16 %v1216
        %v1729 = vunpack.c.l.b16 %v1217
        %v1730 = vunpack.c.l.b16 %v1218
        %v1731 = vunpack.c.l.b16 %v1219
        %v1732 = vunpack.c.l.b16 %v1220
        %v1733 = vunpack.c.l.b16 %v1221
        %v1734 = vunpack.c.l.b16 %v1222
        %v1735 = vunpack.c.l.b16 %v1223
        %v1736 = vunpack.c.l.b16 %v1224
        %v1737 = vunpack.c.l.b16 %v1225
        %v1738 = vunpack.c.l.b16 %v1226
        %v1739 = vunpack.c.l.b16 %v1227
        %v1740 = vunpack.c.l.b16 %v1228
        %v1741 = vunpack.c.l.b16 %v1229
        %v1742 = vunpack.c.l.b16 %v1230
        %v1743 = vunpack.c.l.b16 %v1231
        %v1744 = vunpack.c.l.b16 %v1232
        %v1745 = vunpack.c.l.b16 %v1233
        %v1746 = vunpack.c.l.b16 %v1234
        %v1747 = vunpack.c.l.b16 %v1235
        %v1748 = vunpack.c.l.b16 %v1236
        %v1749 = vunpack.c.l.b16 %v1237
        %v1750 = vunpack.c.l.b16 %v1238
        %v1751 = vunpack.c.l.b16 %v1239
        %v1752 = vunpack.c.l.b16 %v1240
        %v1753 = vunpack.c.l.b16 %v1241
        %v1754 = vunpack.c.l.b16 %v1242
        %v1755 = vunpack.c.l.b16 %v1243
        %v1756 = vunpack.c.l.b16 %v1244
        %v1757 = vunpack.c.l.b16 %v1245
        %v1758 = vunpack.c.l.b16 %v1246
        %v1759 = vunpack.c.l.b16 %v1247
        %v1760 = vunpack.c.l.b16 %v1248
        %v1761 = vunpack.c.l.b16 %v1249
        %v1762 = vunpack.c.l.b16 %v1250
        %v1763 = vunpack.c.l.b16 %v1251
        %v1764 = vunpack.c.l.b16 %v1252
        %v1765 = vunpack.c.l.b16 %v1253
        %v1766 = vunpack.c.l.b16 %v1254
        %v1767 = vunpack.c.l.b16 %v1255
        %v1768 = vunpack.c.l.b16 %v1256
        %v1769 = vunpack.c.l.b16 %v1257
        %v1770 = vunpack.c.l.b16 %v1258
        %v1771 = vunpack.c.l.b16 %v1259
        %v1772 = vunpack.c.l.b16 %v1260
        %v1773 = vunpack.c.l.b16 %v1261
        %v1774 = vunpack.c.l.b16 %v1262
        %v1775 = vunpack.c.l.b16 %v1263
        %v1776 = vunpack.c.l.b16 %v1264
        %v1777 = vunpack.c.l.b16 %v1265
        %v1778 = vunpack.c.l.b16 %v1266
        %v1779 = vunpack.c.l.b16 %v1267
        %v1780 = vunpack.c.l.b16 %v1268
        %v1781 = vunpack.c.l.b16 %v1269
        %v1782 = vunpack.c.l.b16 %v1270
        %v1783 = vunpack.c.l.b16 %v1271
        %v1784 = vunpack.c.l.b16 %v1272
        %v1785 = vunpack.c.l.b16 %v1273
        %v1786 = vunpack.c.l.b16 %v1274
        %v1787 = vpack.c.b16 %v1724, %v1723
        %v1788 = vpack.c.b16 %v1726, %v1725
        %v1789 = vpack.c.b16 %v1728, %v1727
        %v1790 = vpack.c.b16 %v1730, %v1729
        %v1791 = vpack.c.b16 %v1732, %v1731
        %v1792 = vpack.c.b16 %v1734, %v1733
        %v1793 = vpack.c.b16 %v1736, %v1735
        %v1794 = vpack.c.b16 %v1738, %v1737
        %v1795 = vpack.c.b16 %v1740, %v1739
        %v1796 = vpack.c.b16 %v1742, %v1741
        %v1797 = vpack.c.b16 %v1744, %v1743
        %v1798 = vpack.c.b16 %v1746, %v1745
        %v1799 = vpack.c.b16 %v1748, %v1747
        %v1800 = vpack.c.b16 %v1750, %v1749
        %v1801 = vpack.c.b16 %v1752, %v1751
        %v1802 = vpack.c.b16 %v1754, %v1753
        %v1803 = vpack.c.b16 %v1756, %v1755
        %v1804 = vpack.c.b16 %v1758, %v1757
        %v1805 = vpack.c.b16 %v1760, %v1759
        %v1806 = vpack.c.b16 %v1762, %v1761
        %v1807 = vpack.c.b16 %v1764, %v1763
        %v1808 = vpack.c.b16 %v1766, %v1765
        %v1809 = vpack.c.b16 %v1768, %v1767
        %v1810 = vpack.c.b16 %v1770, %v1769
        %v1811 = vpack.c.b16 %v1772, %v1771
        %v1812 = vpack.c.b16 %v1774, %v1773
        %v1813 = vpack.c.b16 %v1776, %v1775
        %v1814 = vpack.c.b16 %v1778, %v1777
        %v1815 = vpack.c.b16 %v1780, %v1779
        %v1816 = vpack.c.b16 %v1782, %v1781
        %v1817 = vpack.c.b16 %v1784, %v1783
        %v1818 = vpack.c.b16 %v1786, %v1785
        %1851 = vmatprep.subr.bf16.mxu0 0
        %1852 = vmatpush1.bf16.msra.mxu0 %v1203
        %1853 = vmatprep.subr.bf16.mxu0 0
        %1854 = vmatpush1.bf16.msra.mxu0 %v1204
        %1855 = vmatprep.subr.bf16.mxu0 0
        %1856 = vmatpush1.bf16.msra.mxu0 %v1205
        %1857 = vmatprep.subr.bf16.mxu0 0
        %1858 = vmatpush1.bf16.msra.mxu0 %v1206
        %1859 = vmatprep.subr.bf16.mxu0 0
        %1860 = vmatpush1.bf16.msra.mxu0 %v1207
        %1861 = vmatprep.subr.bf16.mxu0 0
        %1862 = vmatpush1.bf16.msra.mxu0 %v1208
        %1863 = vmatprep.subr.bf16.mxu0 0
        %1864 = vmatpush1.bf16.msra.mxu0 %v1209
        %1865 = vmatprep.subr.bf16.mxu0 0
        %1866 = vmatpush1.bf16.msra.mxu0 %v1210
        %1867 = vmatprep.subr.bf16.mxu0 0
        %1868 = vmatpush1.bf16.msra.mxu0 0
        %1869 = vmatprep.subr.bf16.mxu0 0
        %1870 = vmatpush1.bf16.msra.mxu0 0
        %1871 = vmatprep.subr.bf16.mxu0 0
        %1872 = vmatpush1.bf16.msra.mxu0 0
        %1873 = vmatprep.subr.bf16.mxu0 0
        %1874 = vmatpush1.bf16.msra.mxu0 0
        %1875 = vmatprep.subr.bf16.mxu0 0
        %1876 = vmatpush1.bf16.msra.mxu0 0
        %1877 = vmatprep.subr.bf16.mxu0 0
        %1878 = vmatpush1.bf16.msra.mxu0 0
        %1879 = vmatprep.subr.bf16.mxu0 0
        %1880 = vmatpush1.bf16.msra.mxu0 0
        %1881 = vmatprep.subr.bf16.mxu0 0
        %1882 = vmatpush1.bf16.msra.mxu0 0
        %1883 = vmatprep.mubr.bf16.mxu0 0
        %1884 = vmatmul.mubr.bf16.gmra.mrb[0].mxu0 %v1787
        %v1885 = vpop.f32.mrb[0].mxu0
        %v1886 = vadd.f32 %v1342, %v1885
        %v1887 = vpop.f32.mrb[0].mxu0
        %v1888 = vpop.f32.mrb[0].mxu0
        %v1889 = vadd.f32 %v1347, %v1888
        %v1890 = vpop.f32.mrb[0].mxu0
        %1891 = vmatprep.mubr.bf16.mxu0 0
        %1892 = vmatmul.mubr.bf16.gmra.mrb[0].mxu0 %v1788
        %v1893 = vpop.f32.mrb[0].mxu0
        %v1894 = vadd.f32 %v1352, %v1893
        %v1895 = vpop.f32.mrb[0].mxu0
        %v1896 = vpop.f32.mrb[0].mxu0
        %v1897 = vadd.f32 %v1357, %v1896
        %v1898 = vpop.f32.mrb[0].mxu0
        %1899 = vmatprep.mubr.bf16.mxu0 0
        %1900 = vmatmul.mubr.bf16.gmra.mrb[0].mxu0 %v1789
        %v1901 = vpop.f32.mrb[0].mxu0
        %v1902 = vadd.f32 %v1362, %v1901
        %v1903 = vpop.f32.mrb[0].mxu0
        %v1904 = vpop.f32.mrb[0].mxu0
        %v1905 = vadd.f32 %v1367, %v1904
        %v1906 = vpop.f32.mrb[0].mxu0
        %1907 = vmatprep.mubr.bf16.mxu0 0
        %1908 = vmatmul.mubr.bf16.gmra.mrb[0].mxu0 %v1790
        %v1909 = vpop.f32.mrb[0].mxu0
        %v1910 = vadd.f32 %v1372, %v1909
        %v1911 = vpop.f32.mrb[0].mxu0
        %v1912 = vpop.f32.mrb[0].mxu0
        %v1913 = vadd.f32 %v1377, %v1912
        %v1914 = vpop.f32.mrb[0].mxu0
        %1915 = vmatprep.mubr.bf16.mxu0 0
        %1916 = vmatmul.mubr.bf16.gmra.mrb[0].mxu0 %v1791
        %v1917 = vpop.f32.mrb[0].mxu0
        %v1918 = vadd.f32 %v1382, %v1917
        %v1919 = vpop.f32.mrb[0].mxu0
        %v1920 = vpop.f32.mrb[0].mxu0
        %v1921 = vadd.f32 %v1387, %v1920
        %v1922 = vpop.f32.mrb[0].mxu0
        %1923 = vmatprep.mubr.bf16.mxu0 0
        %1924 = vmatmul.mubr.bf16.gmra.mrb[0].mxu0 %v1792
        %v1925 = vpop.f32.mrb[0].mxu0
        %v1926 = vadd.f32 %v1392, %v1925
        %v1927 = vpop.f32.mrb[0].mxu0
        %v1928 = vpop.f32.mrb[0].mxu0
        %v1929 = vadd.f32 %v1397, %v1928
        %v1930 = vpop.f32.mrb[0].mxu0
        %1931 = vmatprep.mubr.bf16.mxu0 0
        %1932 = vmatmul.mubr.bf16.gmra.mrb[0].mxu0 %v1793
        %v1933 = vpop.f32.mrb[0].mxu0
        %v1934 = vadd.f32 %v1402, %v1933
        %v1935 = vpop.f32.mrb[0].mxu0
        %v1936 = vpop.f32.mrb[0].mxu0
        %v1937 = vadd.f32 %v1407, %v1936
        %v1938 = vpop.f32.mrb[0].mxu0
        %1939 = vmatprep.mubr.bf16.mxu0 0
        %1940 = vmatmul.mubr.bf16.gmra.mrb[0].mxu0 %v1794
        %v1941 = vpop.f32.mrb[0].mxu0
        %v1942 = vadd.f32 %v1412, %v1941
        %v1943 = vpop.f32.mrb[0].mxu0
        %v1944 = vpop.f32.mrb[0].mxu0
        %v1945 = vadd.f32 %v1417, %v1944
        %v1946 = vpop.f32.mrb[0].mxu0
        %1947 = vmatprep.mubr.bf16.mxu0 0
        %1948 = vmatmul.mubr.bf16.gmra.mrb[0].mxu0 %v1795
        %v1949 = vpop.f32.mrb[0].mxu0
        %v1950 = vadd.f32 %v1422, %v1949
        %v1951 = vpop.f32.mrb[0].mxu0
        %v1952 = vpop.f32.mrb[0].mxu0
        %v1953 = vadd.f32 %v1427, %v1952
        %v1954 = vpop.f32.mrb[0].mxu0
        %1955 = vmatprep.mubr.bf16.mxu0 0
        %1956 = vmatmul.mubr.bf16.gmra.mrb[0].mxu0 %v1796
        %v1957 = vpop.f32.mrb[0].mxu0
        %v1958 = vadd.f32 %v1432, %v1957
        %v1959 = vpop.f32.mrb[0].mxu0
        %v1960 = vpop.f32.mrb[0].mxu0
        %v1961 = vadd.f32 %v1437, %v1960
        %v1962 = vpop.f32.mrb[0].mxu0
        %1963 = vmatprep.mubr.bf16.mxu0 0
        %1964 = vmatmul.mubr.bf16.gmra.mrb[0].mxu0 %v1797
        %v1965 = vpop.f32.mrb[0].mxu0
        %v1966 = vadd.f32 %v1442, %v1965
        %v1967 = vpop.f32.mrb[0].mxu0
        %v1968 = vpop.f32.mrb[0].mxu0
        %v1969 = vadd.f32 %v1447, %v1968
        %v1970 = vpop.f32.mrb[0].mxu0
        %1971 = vmatprep.mubr.bf16.mxu0 0
        %1972 = vmatmul.mubr.bf16.gmra.mrb[0].mxu0 %v1798
        %v1973 = vpop.f32.mrb[0].mxu0
        %v1974 = vadd.f32 %v1452, %v1973
        %v1975 = vpop.f32.mrb[0].mxu0
        %v1976 = vpop.f32.mrb[0].mxu0
        %v1977 = vadd.f32 %v1457, %v1976
        %v1978 = vpop.f32.mrb[0].mxu0
        %1979 = vmatprep.mubr.bf16.mxu0 0
        %1980 = vmatmul.mubr.bf16.gmra.mrb[0].mxu0 %v1799
        %v1981 = vpop.f32.mrb[0].mxu0
        %v1982 = vadd.f32 %v1462, %v1981
        %v1983 = vpop.f32.mrb[0].mxu0
        %v1984 = vpop.f32.mrb[0].mxu0
        %v1985 = vadd.f32 %v1467, %v1984
        %v1986 = vpop.f32.mrb[0].mxu0
        %1987 = vmatprep.mubr.bf16.mxu0 0
        %1988 = vmatmul.mubr.bf16.gmra.mrb[0].mxu0 %v1800
        %v1989 = vpop.f32.mrb[0].mxu0
        %v1990 = vadd.f32 %v1472, %v1989
        %v1991 = vpop.f32.mrb[0].mxu0
        %v1992 = vpop.f32.mrb[0].mxu0
        %v1993 = vadd.f32 %v1477, %v1992
        %v1994 = vpop.f32.mrb[0].mxu0
        %1995 = vmatprep.mubr.bf16.mxu0 0
        %1996 = vmatmul.mubr.bf16.gmra.mrb[0].mxu0 %v1801
        %v1997 = vpop.f32.mrb[0].mxu0
        %v1998 = vadd.f32 %v1482, %v1997
        %v1999 = vpop.f32.mrb[0].mxu0
        %v2000 = vpop.f32.mrb[0].mxu0
        %v2001 = vadd.f32 %v1487, %v2000
        %v2002 = vpop.f32.mrb[0].mxu0
        %2003 = vmatprep.mubr.bf16.mxu0 0
        %2004 = vmatmul.mubr.bf16.gmra.mrb[0].mxu0 %v1802
        %v2005 = vpop.f32.mrb[0].mxu0
        %v2006 = vadd.f32 %v1492, %v2005
        %v2007 = vpop.f32.mrb[0].mxu0
        %v2008 = vpop.f32.mrb[0].mxu0
        %v2009 = vadd.f32 %v1497, %v2008
        %v2010 = vpop.f32.mrb[0].mxu0
        %2011 = vmatprep.mubr.bf16.mxu0 0
        %2012 = vmatmul.mubr.bf16.gmra.mrb[0].mxu0 %v1803
        %v2013 = vpop.f32.mrb[0].mxu0
        %v2014 = vadd.f32 %v1502, %v2013
        %v2015 = vpop.f32.mrb[0].mxu0
        %v2016 = vpop.f32.mrb[0].mxu0
        %v2017 = vadd.f32 %v1507, %v2016
        %v2018 = vpop.f32.mrb[0].mxu0
        %2019 = vmatprep.mubr.bf16.mxu0 0
        %2020 = vmatmul.mubr.bf16.gmra.mrb[0].mxu0 %v1804
        %v2021 = vpop.f32.mrb[0].mxu0
        %v2022 = vadd.f32 %v1512, %v2021
        %v2023 = vpop.f32.mrb[0].mxu0
        %v2024 = vpop.f32.mrb[0].mxu0
        %v2025 = vadd.f32 %v1517, %v2024
        %v2026 = vpop.f32.mrb[0].mxu0
        %2027 = vmatprep.mubr.bf16.mxu0 0
        %2028 = vmatmul.mubr.bf16.gmra.mrb[0].mxu0 %v1805
        %v2029 = vpop.f32.mrb[0].mxu0
        %v2030 = vadd.f32 %v1522, %v2029
        %v2031 = vpop.f32.mrb[0].mxu0
        %v2032 = vpop.f32.mrb[0].mxu0
        %v2033 = vadd.f32 %v1527, %v2032
        %v2034 = vpop.f32.mrb[0].mxu0
        %2035 = vmatprep.mubr.bf16.mxu0 0
        %2036 = vmatmul.mubr.bf16.gmra.mrb[0].mxu0 %v1806
        %v2037 = vpop.f32.mrb[0].mxu0
        %v2038 = vadd.f32 %v1532, %v2037
        %v2039 = vpop.f32.mrb[0].mxu0
        %v2040 = vpop.f32.mrb[0].mxu0
        %v2041 = vadd.f32 %v1537, %v2040
        %v2042 = vpop.f32.mrb[0].mxu0
        %2043 = vmatprep.mubr.bf16.mxu0 0
        %2044 = vmatmul.mubr.bf16.gmra.mrb[0].mxu0 %v1807
        %v2045 = vpop.f32.mrb[0].mxu0
        %v2046 = vadd.f32 %v1542, %v2045
        %v2047 = vpop.f32.mrb[0].mxu0
        %v2048 = vpop.f32.mrb[0].mxu0
        %v2049 = vadd.f32 %v1547, %v2048
        %v2050 = vpop.f32.mrb[0].mxu0
        %2051 = vmatprep.mubr.bf16.mxu0 0
        %2052 = vmatmul.mubr.bf16.gmra.mrb[0].mxu0 %v1808
        %v2053 = vpop.f32.mrb[0].mxu0
        %v2054 = vadd.f32 %v1552, %v2053
        %v2055 = vpop.f32.mrb[0].mxu0
        %v2056 = vpop.f32.mrb[0].mxu0
        %v2057 = vadd.f32 %v1557, %v2056
        %v2058 = vpop.f32.mrb[0].mxu0
        %2059 = vmatprep.mubr.bf16.mxu0 0
        %2060 = vmatmul.mubr.bf16.gmra.mrb[0].mxu0 %v1809
        %v2061 = vpop.f32.mrb[0].mxu0
        %v2062 = vadd.f32 %v1562, %v2061
        %v2063 = vpop.f32.mrb[0].mxu0
        %v2064 = vpop.f32.mrb[0].mxu0
        %v2065 = vadd.f32 %v1567, %v2064
        %v2066 = vpop.f32.mrb[0].mxu0
        %2067 = vmatprep.mubr.bf16.mxu0 0
        %2068 = vmatmul.mubr.bf16.gmra.mrb[0].mxu0 %v1810
        %v2069 = vpop.f32.mrb[0].mxu0
        %v2070 = vadd.f32 %v1572, %v2069
        %v2071 = vpop.f32.mrb[0].mxu0
        %v2072 = vpop.f32.mrb[0].mxu0
        %v2073 = vadd.f32 %v1577, %v2072
        %v2074 = vpop.f32.mrb[0].mxu0
        %2075 = vmatprep.mubr.bf16.mxu0 0
        %2076 = vmatmul.mubr.bf16.gmra.mrb[0].mxu0 %v1811
        %v2077 = vpop.f32.mrb[0].mxu0
        %v2078 = vadd.f32 %v1582, %v2077
        %v2079 = vpop.f32.mrb[0].mxu0
        %v2080 = vpop.f32.mrb[0].mxu0
        %v2081 = vadd.f32 %v1587, %v2080
        %v2082 = vpop.f32.mrb[0].mxu0
        %2083 = vmatprep.mubr.bf16.mxu0 0
        %2084 = vmatmul.mubr.bf16.gmra.mrb[0].mxu0 %v1812
        %v2085 = vpop.f32.mrb[0].mxu0
        %v2086 = vadd.f32 %v1592, %v2085
        %v2087 = vpop.f32.mrb[0].mxu0
        %v2088 = vpop.f32.mrb[0].mxu0
        %v2089 = vadd.f32 %v1597, %v2088
        %v2090 = vpop.f32.mrb[0].mxu0
        %2091 = vmatprep.mubr.bf16.mxu0 0
        %2092 = vmatmul.mubr.bf16.gmra.mrb[0].mxu0 %v1813
        %v2093 = vpop.f32.mrb[0].mxu0
        %v2094 = vadd.f32 %v1602, %v2093
        %v2095 = vpop.f32.mrb[0].mxu0
        %v2096 = vpop.f32.mrb[0].mxu0
        %v2097 = vadd.f32 %v1607, %v2096
        %v2098 = vpop.f32.mrb[0].mxu0
        %2099 = vmatprep.mubr.bf16.mxu0 0
        %2100 = vmatmul.mubr.bf16.gmra.mrb[0].mxu0 %v1814
        %v2101 = vpop.f32.mrb[0].mxu0
        %v2102 = vadd.f32 %v1612, %v2101
        %v2103 = vpop.f32.mrb[0].mxu0
        %v2104 = vpop.f32.mrb[0].mxu0
        %v2105 = vadd.f32 %v1617, %v2104
        %v2106 = vpop.f32.mrb[0].mxu0
        %2107 = vmatprep.mubr.bf16.mxu0 0
        %2108 = vmatmul.mubr.bf16.gmra.mrb[0].mxu0 %v1815
        %v2109 = vpop.f32.mrb[0].mxu0
        %v2110 = vadd.f32 %v1622, %v2109
        %v2111 = vpop.f32.mrb[0].mxu0
        %v2112 = vpop.f32.mrb[0].mxu0
        %v2113 = vadd.f32 %v1627, %v2112
        %v2114 = vpop.f32.mrb[0].mxu0
        %2115 = vmatprep.mubr.bf16.mxu0 0
        %2116 = vmatmul.mubr.bf16.gmra.mrb[0].mxu0 %v1816
        %v2117 = vpop.f32.mrb[0].mxu0
        %v2118 = vadd.f32 %v1632, %v2117
        %v2119 = vpop.f32.mrb[0].mxu0
        %v2120 = vpop.f32.mrb[0].mxu0
        %v2121 = vadd.f32 %v1637, %v2120
        %v2122 = vpop.f32.mrb[0].mxu0
        %2123 = vmatprep.mubr.bf16.mxu0 0
        %2124 = vmatmul.mubr.bf16.gmra.mrb[0].mxu0 %v1817
        %v2125 = vpop.f32.mrb[0].mxu0
        %v2126 = vadd.f32 %v1642, %v2125
        %v2127 = vpop.f32.mrb[0].mxu0
        %v2128 = vpop.f32.mrb[0].mxu0
        %v2129 = vadd.f32 %v1647, %v2128
        %v2130 = vpop.f32.mrb[0].mxu0
        %2131 = vmatprep.mubr.bf16.mxu0 0
        %2132 = vmatmul.mubr.bf16.gmra.mrb[0].mxu0 %v1818
        %v2133 = vpop.f32.mrb[0].mxu0
        %v2134 = vadd.f32 %v1652, %v2133
        %v2135 = vpop.f32.mrb[0].mxu0
        %v2136 = vpop.f32.mrb[0].mxu0
        %v2137 = vadd.f32 %v1657, %v2136
        %v2138 = vpop.f32.mrb[0].mxu0
        %2139 = vdwg.mxu0
        %v2140 = vmax.f32 %v1886, 0.0
        %v2141 = vmax.f32 %v1889, 0.0
        %v2142 = vmax.f32 %v1894, 0.0
        %v2143 = vmax.f32 %v1897, 0.0
        %v2144 = vmax.f32 %v1902, 0.0
        %v2145 = vmax.f32 %v1905, 0.0
        %v2146 = vmax.f32 %v1910, 0.0
        %v2147 = vmax.f32 %v1913, 0.0
        %v2148 = vmax.f32 %v1918, 0.0
        %v2149 = vmax.f32 %v1921, 0.0
        %v2150 = vmax.f32 %v1926, 0.0
        %v2151 = vmax.f32 %v1929, 0.0
        %v2152 = vmax.f32 %v1934, 0.0
        %v2153 = vmax.f32 %v1937, 0.0
        %v2154 = vmax.f32 %v1942, 0.0
        %v2155 = vmax.f32 %v1945, 0.0
        %v2156 = vmax.f32 %v1950, 0.0
        %v2157 = vmax.f32 %v1953, 0.0
        %v2158 = vmax.f32 %v1958, 0.0
        %v2159 = vmax.f32 %v1961, 0.0
        %v2160 = vmax.f32 %v1966, 0.0
        %v2161 = vmax.f32 %v1969, 0.0
        %v2162 = vmax.f32 %v1974, 0.0
        %v2163 = vmax.f32 %v1977, 0.0
        %v2164 = vmax.f32 %v1982, 0.0
        %v2165 = vmax.f32 %v1985, 0.0
        %v2166 = vmax.f32 %v1990, 0.0
        %v2167 = vmax.f32 %v1993, 0.0
        %v2168 = vmax.f32 %v1998, 0.0
        %v2169 = vmax.f32 %v2001, 0.0
        %v2170 = vmax.f32 %v2006, 0.0
        %v2171 = vmax.f32 %v2009, 0.0
        %v2172 = vmax.f32 %v2014, 0.0
        %v2173 = vmax.f32 %v2017, 0.0
        %v2174 = vmax.f32 %v2022, 0.0
        %v2175 = vmax.f32 %v2025, 0.0
        %v2176 = vmax.f32 %v2030, 0.0
        %v2177 = vmax.f32 %v2033, 0.0
        %v2178 = vmax.f32 %v2038, 0.0
        %v2179 = vmax.f32 %v2041, 0.0
        %v2180 = vmax.f32 %v2046, 0.0
        %v2181 = vmax.f32 %v2049, 0.0
        %v2182 = vmax.f32 %v2054, 0.0
        %v2183 = vmax.f32 %v2057, 0.0
        %v2184 = vmax.f32 %v2062, 0.0
        %v2185 = vmax.f32 %v2065, 0.0
        %v2186 = vmax.f32 %v2070, 0.0
        %v2187 = vmax.f32 %v2073, 0.0
        %v2188 = vmax.f32 %v2078, 0.0
        %v2189 = vmax.f32 %v2081, 0.0
        %v2190 = vmax.f32 %v2086, 0.0
        %v2191 = vmax.f32 %v2089, 0.0
        %v2192 = vmax.f32 %v2094, 0.0
        %v2193 = vmax.f32 %v2097, 0.0
        %v2194 = vmax.f32 %v2102, 0.0
        %v2195 = vmax.f32 %v2105, 0.0
        %v2196 = vmax.f32 %v2110, 0.0
        %v2197 = vmax.f32 %v2113, 0.0
        %v2198 = vmax.f32 %v2118, 0.0
        %v2199 = vmax.f32 %v2121, 0.0
        %v2200 = vmax.f32 %v2126, 0.0
        %v2201 = vmax.f32 %v2129, 0.0
        %v2202 = vmax.f32 %v2134, 0.0
        %v2203 = vmax.f32 %v2137, 0.0
        %2204 = vst [vmem:[%s401] sm:$0xff] %v2140
        %2205 = vst [vmem:[%s401 + $0x8] sm:$0xff] %v2141
        %2206 = vst [vmem:[%s401 + $0x10] sm:$0xff] %v2142
        %2207 = vst [vmem:[%s401 + $0x18] sm:$0xff] %v2143
        %2208 = vst [vmem:[%s401 + $0x20] sm:$0xff] %v2144
        %2209 = vst [vmem:[%s401 + $0x28] sm:$0xff] %v2145
        %2210 = vst [vmem:[%s401 + $0x30] sm:$0xff] %v2146
        %2211 = vst [vmem:[%s401 + $0x38] sm:$0xff] %v2147
        %2212 = vst [vmem:[%s401 + $0x40] sm:$0xff] %v2148
        %2213 = vst [vmem:[%s401 + $0x48] sm:$0xff] %v2149
        %2214 = vst [vmem:[%s401 + $0x50] sm:$0xff] %v2150
        %2215 = vst [vmem:[%s401 + $0x58] sm:$0xff] %v2151
        %2216 = vst [vmem:[%s401 + $0x60] sm:$0xff] %v2152
        %2217 = vst [vmem:[%s401 + $0x68] sm:$0xff] %v2153
        %2218 = vst [vmem:[%s401 + $0x70] sm:$0xff] %v2154
        %2219 = vst [vmem:[%s401 + $0x78] sm:$0xff] %v2155
        %2220 = vst [vmem:[%s401 + $0x80] sm:$0xff] %v2156
        %2221 = vst [vmem:[%s401 + $0x88] sm:$0xff] %v2157
        %2222 = vst [vmem:[%s401 + $0x90] sm:$0xff] %v2158
        %2223 = vst [vmem:[%s401 + $0x98] sm:$0xff] %v2159
        %2224 = vst [vmem:[%s401 + $0xa0] sm:$0xff] %v2160
        %2225 = vst [vmem:[%s401 + $0xa8] sm:$0xff] %v2161
        %2226 = vst [vmem:[%s401 + $0xb0] sm:$0xff] %v2162
        %2227 = vst [vmem:[%s401 + $0xb8] sm:$0xff] %v2163
        %2228 = vst [vmem:[%s401 + $0xc0] sm:$0xff] %v2164
        %2229 = vst [vmem:[%s401 + $0xc8] sm:$0xff] %v2165
        %2230 = vst [vmem:[%s401 + $0xd0] sm:$0xff] %v2166
        %2231 = vst [vmem:[%s401 + $0xd8] sm:$0xff] %v2167
        %2232 = vst [vmem:[%s401 + $0xe0] sm:$0xff] %v2168
        %2233 = vst [vmem:[%s401 + $0xe8] sm:$0xff] %v2169
        %2234 = vst [vmem:[%s401 + $0xf0] sm:$0xff] %v2170
        %2235 = vst [vmem:[%s401 + $0xf8] sm:$0xff] %v2171
        %2236 = vst [vmem:[%s401 + $0x100] sm:$0xff] %v2172
        %2237 = vst [vmem:[%s401 + $0x108] sm:$0xff] %v2173
        %2238 = vst [vmem:[%s401 + $0x110] sm:$0xff] %v2174
        %2239 = vst [vmem:[%s401 + $0x118] sm:$0xff] %v2175
        %2240 = vst [vmem:[%s401 + $0x120] sm:$0xff] %v2176
        %2241 = vst [vmem:[%s401 + $0x128] sm:$0xff] %v2177
        %2242 = vst [vmem:[%s401 + $0x130] sm:$0xff] %v2178
        %2243 = vst [vmem:[%s401 + $0x138] sm:$0xff] %v2179
        %2244 = vst [vmem:[%s401 + $0x140] sm:$0xff] %v2180
        %2245 = vst [vmem:[%s401 + $0x148] sm:$0xff] %v2181
        %2246 = vst [vmem:[%s401 + $0x150] sm:$0xff] %v2182
        %2247 = vst [vmem:[%s401 + $0x158] sm:$0xff] %v2183
        %2248 = vst [vmem:[%s401 + $0x160] sm:$0xff] %v2184
        %2249 = vst [vmem:[%s401 + $0x168] sm:$0xff] %v2185
        %2250 = vst [vmem:[%s401 + $0x170] sm:$0xff] %v2186
        %2251 = vst [vmem:[%s401 + $0x178] sm:$0xff] %v2187
        %2252 = vst [vmem:[%s401 + $0x180] sm:$0xff] %v2188
        %2253 = vst [vmem:[%s401 + $0x188] sm:$0xff] %v2189
        %2254 = vst [vmem:[%s401 + $0x190] sm:$0xff] %v2190
        %2255 = vst [vmem:[%s401 + $0x198] sm:$0xff] %v2191
        %2256 = vst [vmem:[%s401 + $0x1a0] sm:$0xff] %v2192
        %2257 = vst [vmem:[%s401 + $0x1a8] sm:$0xff] %v2193
        %2258 = vst [vmem:[%s401 + $0x1b0] sm:$0xff] %v2194
        %2259 = vst [vmem:[%s401 + $0x1b8] sm:$0xff] %v2195
        %2260 = vst [vmem:[%s401 + $0x1c0] sm:$0xff] %v2196
        %2261 = vst [vmem:[%s401 + $0x1c8] sm:$0xff] %v2197
        %2262 = vst [vmem:[%s401 + $0x1d0] sm:$0xff] %v2198
        %2263 = vst [vmem:[%s401 + $0x1d8] sm:$0xff] %v2199
        %2264 = vst [vmem:[%s401 + $0x1e0] sm:$0xff] %v2200
        %2265 = vst [vmem:[%s401 + $0x1e8] sm:$0xff] %v2201
        %2266 = vst [vmem:[%s401 + $0x1f0] sm:$0xff] %v2202
        %2267 = vst [vmem:[%s401 + $0x1f8] sm:$0xff] %v2203
        %s2268 = sand.u32 %s285, 1
        %s2269 = scalar_lea.sflag [#allocation3], %s2268
        %s2270 = sand.u32 %s285, 1
        %s2271 = smul.addr %s2270, 512
        %s2272 = scalar_lea.vmem [#allocation2], %s2271
        // Predicated region
        $region65: #{tpu_custom_call.1} parent=63 // pred_check
          %p2273 = pneg %p295
        $region66: #{tpu_custom_call.1} parent=63 // pred_check_branch
          %2275 = sbr.rel (%p2273) target = $region68
        $region67: #{tpu_custom_call.1} parent=63 // pred_region
          %s2277 = ssub.s32 8192, 8192
          %2278 = vsyncadd %s2269, %s2277
          %s2279 = smul.addr %s29, 128
          %s2280 = sadd.s32 %s30, %s2279
          %s2281 = smul.addr %s2280, 128
          %s2282 = scalar_lea.hbm %s11, %s2281
          %s2283 = sshll.u32 %s2272, 4
          %s2284 = int_to_ptr.vmem [resolvable:$true] %s2283
          %2289 = dma.vmem_to_hbm [thread:$0]  %s2284, 8192, %s2282, %s2269, 128, 256, 8
        $region68: #{tpu_custom_call.1} parent=63 // pred_fallthru
          _
      $region64: #{tpu_custom_call.1} parent=5 // pred_fallthru
        _
      %p2290 = scmp.le.s32.totalorder 2, %s20
      // Predicated region
      $region69: #{tpu_custom_call.1} parent=5 // pred_check
        %p2291 = pneg %p2290
      $region70: #{tpu_custom_call.1} parent=5 // pred_check_branch
        %2293 = sbr.rel (%p2291) target = $region72
      $region71: #{tpu_custom_call.1} parent=5 // pred_region
        %s2294 = ssub.s32 %s20, 2
        // Predicated region
        $region73: #{tpu_custom_call.1} parent=71 // pred_check
          %p2295 = pneg %p301
        $region74: #{tpu_custom_call.1} parent=71 // pred_check_branch
          %2297 = sbr.rel (%p2295) target = $region76
        $region75: #{tpu_custom_call.1} parent=71 // pred_region
          %s2298 = sand.u32 %s286, 1
          %s2299 = scalar_lea.sflag [#allocation3], %s2298
          %s2300 = sand.u32 %s286, 1
          %s2301 = smul.addr %s2300, 512
          %s2302 = scalar_lea.vmem [#allocation2], %s2301
          %2303 = dma.done %s2299, 8192
        $region76: #{tpu_custom_call.1} parent=71 // pred_fallthru
          _
      $region72: #{tpu_custom_call.1} parent=5 // pred_fallthru
        _
    $region6: #{tpu_custom_call.1} parent=1 // loop_footer
      %s24 = sadd.s32 1, %s20
    $region7: #{tpu_custom_call.1} parent=1 // loop_footer_branch
      %19 = sbr.rel target = $region3
    $region8: #{tpu_custom_call.1} parent=1 // loop_exit
      _
    %2304 = vsyncpa [#allocation3], 1
    %s2305 = scalar_lea.sflag [#allocation3], 1
    %2306 = vsyncpa %s2305, 1

</llo_original>
